<compile_context>
chip_gen: v7x
topology: tpu7x:2x2x1
jax: 0.10.0
libtpu: 0.0.40
codegen_flags: <defaults>
</compile_context>

<pallas_src>
import functools
import math

import jax
import jax.numpy as jnp
from jax import lax
from jax.experimental import pallas as pl
from jax.experimental.pallas import tpu as pltpu

_LOG2E = 1.4426950408889634  # log2(e)


def _risk_budgeting_kernel(mat_ref, b_ref, w_ref, *,
                           max_weight, force_symmetric, n_iters, eta, unroll):
    A = mat_ref.shape[0]
    mat = mat_ref[...].astype(jnp.float32)                        # (A, A)

    # covariance = matrix @ matrix.T (contract last axes -> no explicit transpose)
    if force_symmetric:
        cov = lax.dot_general(mat, mat, (((1,), (1,)), ((), ())),
                              preferred_element_type=jnp.float32)
    else:
        cov = mat

    # Q = cov^T @ cov, computed once.  Row-vector gradient of the quadratic term
    # 0.5*||cov @ w||^2 is then a single matmul per iteration: g_quad = w @ Q.
    q = lax.dot_general(cov, cov, (((0,), (0,)), ((), ())),
                        preferred_element_type=jnp.float32)       # (A, A)

    # relu + normalize the risk budgets (guard: all-zero budgets -> uniform).
    b_raw = jnp.maximum(b_ref[...].astype(jnp.float32), 0.0)      # (1, A)
    b_sum = jnp.sum(b_raw, keepdims=True)                         # (1, 1)
    b = jnp.where(b_sum > 0.0, b_raw / b_sum, jnp.full_like(b_raw, 1.0 / A))

    # Curvature-aware step size: eta_s = eta * A / trace(Q); trace(Q) == ||cov||_F^2.
    # Equals the plain eta for the module's identity-matrix init.
    tr_q = jnp.maximum(jnp.sum(cov * cov, keepdims=True), 1e-30)  # (1, 1)
    eta_s = (eta * A) / tr_q                                      # (1, 1)

    # Fold step size AND log2(e) into the constants so the multiplicative update
    # is a single exp2 (base-2 EUP op, no dependent pre-scale):
    #   w <- w * 2**(w @ qe2 + be2 / w)   ==   w * exp(-eta*(w@Q - b/w))
    qe2 = (-_LOG2E) * eta_s * q                                   # (A, A) f32
    be2 = _LOG2E * eta_s * b                                      # (1, A) f32

    # bf16 MXU operands (once, outside the loop).  Accumulation stays f32;
    # everything elementwise stays f32 (v5e has no bf16 VPU/EUP).
    qe2_bf16 = qe2.astype(jnp.bfloat16)                           # (A, A) bf16

    w0 = jnp.full((1, A), 1.0 / A, dtype=jnp.float32)

    def step(w):
        g = jnp.dot(w.astype(jnp.bfloat16), qe2_bf16,
                    preferred_element_type=jnp.float32)           # (1, A) f32 acc
        # clamp keeps 1/w finite if a zero-budget weight decays toward 0
        g = g + be2 * pl.reciprocal(jnp.maximum(w, 1e-12), approx=True)
        w = w * jnp.exp2(g)                                       # stays > 0
        w = w * pl.reciprocal(jnp.sum(w, axis=-1, keepdims=True), approx=True)
        if max_weight < 1.0:   # statically elided when it is a mathematical no-op
            # TODO(synk): exact box-constrained simplex projection; clip+renorm approx.
            w = jnp.minimum(w, max_weight)
            w = w * pl.reciprocal(jnp.sum(w, axis=-1, keepdims=True), approx=True)
        return w

    def body(_, w):
        for _u in range(unroll):          # wide unroll window for the LLO scheduler
            w = step(w)
        return w

    w = lax.fori_loop(0, n_iters // unroll, body, w0)
    for _r in range(n_iters % unroll):
        w = step(w)

    # one exact renormalization so the output sums to 1 at f32 precision
    w_ref[...] = w / jnp.sum(w, axis=-1, keepdims=True)


def numerical_risk_network_forward(x, matrix, budgets, *,
                                   max_weight=1.0, force_symmetric=True,
                                   n_iters=500, eta=0.05, unroll=20):
    """JAX/Pallas equivalent of NumericalRiskNetwork.forward."""
    n = x.shape[0]                       # x is only consumed for its batch size
    A = matrix.shape[0]
    matrix = matrix.astype(jnp.float32)
    budgets_2d = budgets.reshape(1, A).astype(jnp.float32)

    kernel = functools.partial(
        _risk_budgeting_kernel,
        max_weight=float(max_weight),
        force_symmetric=bool(force_symmetric),
        n_iters=int(n_iters),
        eta=float(eta),
        unroll=int(unroll),
    )

    # Honest cost hint: ~n_iters MXU matmuls + setup matmuls; exp + 2 reciprocals
    # per iteration; tiny memory traffic.  Lets XLA overlap surrounding HLOs with
    # this long-latency custom call.
    cost = pl.CostEstimate(
        flops=int(n_iters * 2 * A * A + 4 * A * A * A),
        transcendentals=int(n_iters * 3 * A),
        bytes_accessed=int((A * A + 3 * A) * 4),
    )

    # NOTE(perf): no DMA/pipelining/layout work on purpose — total traffic is a
    # couple of KiB; the binding resource is the serial MXU->VPU->EUP->XLU chain.
    # If n_assets ever grows to the thousands, set vmem_limit_bytes and tile the
    # cov / Q setup matmuls over K (v7x has 64 MiB VMEM vs 128 MiB on v5e/v6e).
    w = pl.pallas_call(
        kernel,
        out_shape=jax.ShapeDtypeStruct((1, A), jnp.float32),
        grid=(1,),                                         # single solve: inputs are shared
        in_specs=[
            pl.BlockSpec((A, A), lambda i: (0, 0)),        # shared parameter matrix
            pl.BlockSpec((1, A), lambda i: (0, 0)),        # shared budgets
        ],
        out_specs=pl.BlockSpec((1, A), lambda i: (0, 0)),
        compiler_params=pltpu.CompilerParams(
            dimension_semantics=("arbitrary",)),
        cost_estimate=cost,
    )(matrix, budgets_2d)

    # Every sample sees the same covariance & budgets -> identical weights.
    return jnp.broadcast_to(w, (n, A))


def _reference_weights(matrix, budgets, *, max_weight=1.0, force_symmetric=True,
                       n_iters=500, eta=0.05):
    """Pure-JAX, exact-reciprocal f32 reference of the same mirror-descent scheme."""
    A = matrix.shape[0]
    matrix = matrix.astype(jnp.float32)
    cov = matrix @ matrix.T if force_symmetric else matrix
    q = cov.T @ cov
    b = jnp.maximum(budgets.astype(jnp.float32), 0.0)
    s = b.sum()
    b = jnp.where(s > 0.0, b / s, jnp.full_like(b, 1.0 / A))
    eta_s = eta * A / jnp.maximum(jnp.sum(cov * cov), 1e-30)
    w0 = jnp.full((A,), 1.0 / A, jnp.float32)

    def body(_, w):
        g = -eta_s * (w @ q - b / jnp.maximum(w, 1e-12))
        w = w * jnp.exp(g)
        w = w / w.sum()
        if max_weight < 1.0:
            w = jnp.minimum(w, max_weight)
            w = w / w.sum()
        return w

    w = lax.fori_loop(0, n_iters, body, w0)
    return w / w.sum()


if __name__ == "__main__":
    n_assets = 16
    batch, channels, lookback = 2, 4, 16

    key = jax.random.PRNGKey(0)
    k_x, k_b = jax.random.split(key)

    # deterministic parameter init, mirroring the PyTorch module's __init__
    matrix = jnp.eye(n_assets, dtype=jnp.float32)                       # nn.Parameter(torch.eye)
    budgets = jax.random.uniform(k_b, (n_assets,), jnp.float32,
                                 minval=1e-4, maxval=5e-4)              # uniform_(1e-4, 5e-4)

    # input: only its batch size is consumed by the forward pass
    x = jax.random.normal(k_x, (batch, channels, lookback, n_assets), jnp.float32)

    weights = numerical_risk_network_forward(x, matrix, budgets,
                                             max_weight=1.0,
                                             force_symmetric=True)
    weights = jax.block_until_ready(weights)

    assert weights.shape == (batch, n_assets)
    assert bool(jnp.all(jnp.isfinite(weights)))
    assert bool(jnp.all(weights > 0.0))
    assert bool(jnp.allclose(jnp.sum(weights, axis=-1), 1.0, atol=1e-3))

    # Validate bf16-MXU + approx-reciprocal kernel against the exact f32 reference.
    ref = jax.block_until_ready(_reference_weights(matrix, budgets,
                                                   max_weight=1.0,
                                                   force_symmetric=True))
    max_diff = float(jnp.max(jnp.abs(weights[0] - ref)))
    assert max_diff < 5e-3, f"kernel vs exact-f32 reference max|diff|={max_diff}"

    print("KERNEL_OK")
</pallas_src>

<mosaic_0001>
module attributes {stable_mosaic.version = 11 : i64} {
  func.func @_risk_budgeting_kernel(%arg0: i32, %arg1: memref<16x16xf32, #tpu.memory_space<vmem>>, %arg2: memref<1x16xf32, #tpu.memory_space<vmem>>, %arg3: memref<1x16xf32, #tpu.memory_space<vmem>>) attributes {dimension_semantics = [#tpu.dimension_semantics<arbitrary>], iteration_bounds = array<i64: 1>, scalar_prefetch = 0 : i64, scratch_operands = 0 : i64, tpu.core_type = #tpu.core_type<tc>, window_params = [{pipeline_mode = #tpu.pipeline_mode<synchronous>, transform_indices = @transform_0, window_bounds = array<i64: 16, 16>}, {pipeline_mode = #tpu.pipeline_mode<synchronous>, transform_indices = @transform_1, window_bounds = array<i64: 1, 16>}, {pipeline_mode = #tpu.pipeline_mode<synchronous>, transform_indices = @transform_2, window_bounds = array<i64: 1, 16>}]} {
    %c0 = arith.constant 0 : index
    %c0_0 = arith.constant 0 : index
    %0 = vector.load %arg1[%c0, %c0_0] : memref<16x16xf32, #tpu.memory_space<vmem>>, vector<16x16xf32>
    %cst = arith.constant dense<0.000000e+00> : vector<16x16xf32>
    %1 = tpu.matmul %0, %0, %cst {dimension_numbers = #tpu.dot_dimension_numbers<[1], [1], [0], [0], [0, 0, 1, 0], [], []>} : vector<16x16xf32>, vector<16x16xf32>, vector<16x16xf32> -> vector<16x16xf32>
    %cst_1 = arith.constant dense<0.000000e+00> : vector<16x16xf32>
    %2 = tpu.matmul %1, %1, %cst_1 {dimension_numbers = #tpu.dot_dimension_numbers<[0], [0], [1], [1], [0, 1, 1, 1], [], []>} : vector<16x16xf32>, vector<16x16xf32>, vector<16x16xf32> -> vector<16x16xf32>
    %c0_2 = arith.constant 0 : index
    %c0_3 = arith.constant 0 : index
    %3 = vector.load %arg2[%c0_2, %c0_3] : memref<1x16xf32, #tpu.memory_space<vmem>>, vector<1x16xf32>
    %cst_4 = arith.constant 0.000000e+00 : f32
    %4 = vector.broadcast %cst_4 : f32 to vector<1x16xf32>
    %5 = arith.maximumf %3, %4 : vector<1x16xf32>
    %6 = vector.shape_cast %5 : vector<1x16xf32> to vector<1x1x16xf32>
    %cst_5 = arith.constant dense<0.000000e+00> : vector<1xf32>
    %7 = vector.multi_reduction <add>, %6, %cst_5 [1, 2] : vector<1x1x16xf32> to vector<1xf32>
    %8 = vector.shape_cast %7 : vector<1xf32> to vector<1x1x1xf32>
    %9 = vector.extract %8[0, 0, 0] : f32 from vector<1x1x1xf32>
    %10 = vector.broadcast %9 : f32 to vector<1x1xf32>
    %cst_6 = arith.constant 0.000000e+00 : f32
    %11 = vector.broadcast %cst_6 : f32 to vector<1x1xf32>
    %12 = arith.cmpf ogt, %10, %11 : vector<1x1xf32>
    %13 = vector.broadcast %10 : vector<1x1xf32> to vector<1x16xf32>
    %14 = arith.divf %5, %13 : vector<1x16xf32>
    %cst_7 = arith.constant 6.250000e-02 : f32
    %15 = vector.broadcast %cst_7 : f32 to vector<1x16xf32>
    %16 = vector.shape_cast %12 : vector<1x1xi1> to vector<1x1xi1>
    %17 = vector.broadcast %16 : vector<1x1xi1> to vector<1x16xi1>
    %18 = arith.select %17, %14, %15 : vector<1x16xi1>, vector<1x16xf32>
    %19 = arith.mulf %1, %1 : vector<16x16xf32>
    %20 = vector.shape_cast %19 : vector<16x16xf32> to vector<1x16x16xf32>
    %cst_8 = arith.constant dense<0.000000e+00> : vector<1xf32>
    %21 = vector.multi_reduction <add>, %20, %cst_8 [1, 2] : vector<1x16x16xf32> to vector<1xf32>
    %22 = vector.shape_cast %21 : vector<1xf32> to vector<1x1x1xf32>
    %23 = vector.extract %22[0, 0, 0] : f32 from vector<1x1x1xf32>
    %24 = vector.broadcast %23 : f32 to vector<1x1xf32>
    %cst_9 = arith.constant 1.000000e-30 : f32
    %25 = vector.broadcast %cst_9 : f32 to vector<1x1xf32>
    %26 = arith.maximumf %24, %25 : vector<1x1xf32>
    %cst_10 = arith.constant 8.000000e-01 : f32
    %27 = vector.broadcast %cst_10 : f32 to vector<1x1xf32>
    %28 = arith.divf %27, %26 : vector<1x1xf32>
    %cst_11 = arith.constant -1.44269502 : f32
    %29 = vector.broadcast %cst_11 : f32 to vector<1x1xf32>
    %30 = arith.mulf %29, %28 : vector<1x1xf32>
    %31 = vector.broadcast %30 : vector<1x1xf32> to vector<16x16xf32>
    %32 = arith.mulf %31, %2 : vector<16x16xf32>
    %cst_12 = arith.constant 1.44269502 : f32
    %33 = vector.broadcast %cst_12 : f32 to vector<1x1xf32>
    %34 = arith.mulf %33, %28 : vector<1x1xf32>
    %35 = vector.broadcast %34 : vector<1x1xf32> to vector<1x16xf32>
    %36 = arith.mulf %35, %18 : vector<1x16xf32>
    %37 = arith.truncf %32 : vector<16x16xf32> to vector<16x16xbf16>
    %cst_13 = arith.constant 6.250000e-02 : f32
    %38 = vector.broadcast %cst_13 : f32 to vector<1x16xf32>
    %c0_i32 = arith.constant 0 : i32
    %c25_i32 = arith.constant 25 : i32
    %39 = arith.addi %c0_i32, %c25_i32 : i32
    %c1_i32 = arith.constant 1 : i32
    %40 = scf.for %arg4 = %c0_i32 to %39 step %c1_i32 iter_args(%arg5 = %38) -> (vector<1x16xf32>)  : i32 {
      %46 = arith.truncf %arg5 : vector<1x16xf32> to vector<1x16xbf16>
      %cst_17 = arith.constant dense<0.000000e+00> : vector<1x16xf32>
      %47 = tpu.matmul %46, %37, %cst_17 {dimension_numbers = #tpu.dot_dimension_numbers<[1], [0], [0], [1], [0, 0, 1, 1], [], []>} : vector<1x16xbf16>, vector<16x16xbf16>, vector<1x16xf32> -> vector<1x16xf32>
      %cst_18 = arith.constant 9.99999996E-13 : f32
      %48 = vector.broadcast %cst_18 : f32 to vector<1x16xf32>
      %49 = arith.maximumf %arg5, %48 : vector<1x16xf32>
      %50 = tpu.reciprocal %49 {approx = true} : vector<1x16xf32> -> vector<1x16xf32>
      %51 = arith.mulf %36, %50 : vector<1x16xf32>
      %52 = arith.addf %47, %51 : vector<1x16xf32>
      %53 = math.exp2 %52 : vector<1x16xf32>
      %54 = arith.mulf %arg5, %53 : vector<1x16xf32>
      %cst_19 = arith.constant dense<0.000000e+00> : vector<1xf32>
      %55 = vector.multi_reduction <add>, %54, %cst_19 [1] : vector<1x16xf32> to vector<1xf32>
      %56 = vector.shape_cast %55 : vector<1xf32> to vector<1x1xf32>
      %57 = tpu.reciprocal %56 {approx = true} : vector<1x1xf32> -> vector<1x1xf32>
      %58 = vector.broadcast %57 : vector<1x1xf32> to vector<1x16xf32>
      %59 = arith.mulf %54, %58 : vector<1x16xf32>
      %60 = arith.truncf %59 : vector<1x16xf32> to vector<1x16xbf16>
      %cst_20 = arith.constant dense<0.000000e+00> : vector<1x16xf32>
      %61 = tpu.matmul %60, %37, %cst_20 {dimension_numbers = #tpu.dot_dimension_numbers<[1], [0], [0], [1], [0, 0, 1, 1], [], []>} : vector<1x16xbf16>, vector<16x16xbf16>, vector<1x16xf32> -> vector<1x16xf32>
      %cst_21 = arith.constant 9.99999996E-13 : f32
      %62 = vector.broadcast %cst_21 : f32 to vector<1x16xf32>
      %63 = arith.maximumf %59, %62 : vector<1x16xf32>
      %64 = tpu.reciprocal %63 {approx = true} : vector<1x16xf32> -> vector<1x16xf32>
      %65 = arith.mulf %36, %64 : vector<1x16xf32>
      %66 = arith.addf %61, %65 : vector<1x16xf32>
      %67 = math.exp2 %66 : vector<1x16xf32>
      %68 = arith.mulf %59, %67 : vector<1x16xf32>
      %cst_22 = arith.constant dense<0.000000e+00> : vector<1xf32>
      %69 = vector.multi_reduction <add>, %68, %cst_22 [1] : vector<1x16xf32> to vector<1xf32>
      %70 = vector.shape_cast %69 : vector<1xf32> to vector<1x1xf32>
      %71 = tpu.reciprocal %70 {approx = true} : vector<1x1xf32> -> vector<1x1xf32>
      %72 = vector.broadcast %71 : vector<1x1xf32> to vector<1x16xf32>
      %73 = arith.mulf %68, %72 : vector<1x16xf32>
      %74 = arith.truncf %73 : vector<1x16xf32> to vector<1x16xbf16>
      %cst_23 = arith.constant dense<0.000000e+00> : vector<1x16xf32>
      %75 = tpu.matmul %74, %37, %cst_23 {dimension_numbers = #tpu.dot_dimension_numbers<[1], [0], [0], [1], [0, 0, 1, 1], [], []>} : vector<1x16xbf16>, vector<16x16xbf16>, vector<1x16xf32> -> vector<1x16xf32>
      %cst_24 = arith.constant 9.99999996E-13 : f32
      %76 = vector.broadcast %cst_24 : f32 to vector<1x16xf32>
      %77 = arith.maximumf %73, %76 : vector<1x16xf32>
      %78 = tpu.reciprocal %77 {approx = true} : vector<1x16xf32> -> vector<1x16xf32>
      %79 = arith.mulf %36, %78 : vector<1x16xf32>
      %80 = arith.addf %75, %79 : vector<1x16xf32>
      %81 = math.exp2 %80 : vector<1x16xf32>
      %82 = arith.mulf %73, %81 : vector<1x16xf32>
      %cst_25 = arith.constant dense<0.000000e+00> : vector<1xf32>
      %83 = vector.multi_reduction <add>, %82, %cst_25 [1] : vector<1x16xf32> to vector<1xf32>
      %84 = vector.shape_cast %83 : vector<1xf32> to vector<1x1xf32>
      %85 = tpu.reciprocal %84 {approx = true} : vector<1x1xf32> -> vector<1x1xf32>
      %86 = vector.broadcast %85 : vector<1x1xf32> to vector<1x16xf32>
      %87 = arith.mulf %82, %86 : vector<1x16xf32>
      %88 = arith.truncf %87 : vector<1x16xf32> to vector<1x16xbf16>
      %cst_26 = arith.constant dense<0.000000e+00> : vector<1x16xf32>
      %89 = tpu.matmul %88, %37, %cst_26 {dimension_numbers = #tpu.dot_dimension_numbers<[1], [0], [0], [1], [0, 0, 1, 1], [], []>} : vector<1x16xbf16>, vector<16x16xbf16>, vector<1x16xf32> -> vector<1x16xf32>
      %cst_27 = arith.constant 9.99999996E-13 : f32
      %90 = vector.broadcast %cst_27 : f32 to vector<1x16xf32>
      %91 = arith.maximumf %87, %90 : vector<1x16xf32>
      %92 = tpu.reciprocal %91 {approx = true} : vector<1x16xf32> -> vector<1x16xf32>
      %93 = arith.mulf %36, %92 : vector<1x16xf32>
      %94 = arith.addf %89, %93 : vector<1x16xf32>
      %95 = math.exp2 %94 : vector<1x16xf32>
      %96 = arith.mulf %87, %95 : vector<1x16xf32>
      %cst_28 = arith.constant dense<0.000000e+00> : vector<1xf32>
      %97 = vector.multi_reduction <add>, %96, %cst_28 [1] : vector<1x16xf32> to vector<1xf32>
      %98 = vector.shape_cast %97 : vector<1xf32> to vector<1x1xf32>
      %99 = tpu.reciprocal %98 {approx = true} : vector<1x1xf32> -> vector<1x1xf32>
      %100 = vector.broadcast %99 : vector<1x1xf32> to vector<1x16xf32>
      %101 = arith.mulf %96, %100 : vector<1x16xf32>
      %102 = arith.truncf %101 : vector<1x16xf32> to vector<1x16xbf16>
      %cst_29 = arith.constant dense<0.000000e+00> : vector<1x16xf32>
      %103 = tpu.matmul %102, %37, %cst_29 {dimension_numbers = #tpu.dot_dimension_numbers<[1], [0], [0], [1], [0, 0, 1, 1], [], []>} : vector<1x16xbf16>, vector<16x16xbf16>, vector<1x16xf32> -> vector<1x16xf32>
      %cst_30 = arith.constant 9.99999996E-13 : f32
      %104 = vector.broadcast %cst_30 : f32 to vector<1x16xf32>
      %105 = arith.maximumf %101, %104 : vector<1x16xf32>
      %106 = tpu.reciprocal %105 {approx = true} : vector<1x16xf32> -> vector<1x16xf32>
      %107 = arith.mulf %36, %106 : vector<1x16xf32>
      %108 = arith.addf %103, %107 : vector<1x16xf32>
      %109 = math.exp2 %108 : vector<1x16xf32>
      %110 = arith.mulf %101, %109 : vector<1x16xf32>
      %cst_31 = arith.constant dense<0.000000e+00> : vector<1xf32>
      %111 = vector.multi_reduction <add>, %110, %cst_31 [1] : vector<1x16xf32> to vector<1xf32>
      %112 = vector.shape_cast %111 : vector<1xf32> to vector<1x1xf32>
      %113 = tpu.reciprocal %112 {approx = true} : vector<1x1xf32> -> vector<1x1xf32>
      %114 = vector.broadcast %113 : vector<1x1xf32> to vector<1x16xf32>
      %115 = arith.mulf %110, %114 : vector<1x16xf32>
      %116 = arith.truncf %115 : vector<1x16xf32> to vector<1x16xbf16>
      %cst_32 = arith.constant dense<0.000000e+00> : vector<1x16xf32>
      %117 = tpu.matmul %116, %37, %cst_32 {dimension_numbers = #tpu.dot_dimension_numbers<[1], [0], [0], [1], [0, 0, 1, 1], [], []>} : vector<1x16xbf16>, vector<16x16xbf16>, vector<1x16xf32> -> vector<1x16xf32>
      %cst_33 = arith.constant 9.99999996E-13 : f32
      %118 = vector.broadcast %cst_33 : f32 to vector<1x16xf32>
      %119 = arith.maximumf %115, %118 : vector<1x16xf32>
      %120 = tpu.reciprocal %119 {approx = true} : vector<1x16xf32> -> vector<1x16xf32>
      %121 = arith.mulf %36, %120 : vector<1x16xf32>
      %122 = arith.addf %117, %121 : vector<1x16xf32>
      %123 = math.exp2 %122 : vector<1x16xf32>
      %124 = arith.mulf %115, %123 : vector<1x16xf32>
      %cst_34 = arith.constant dense<0.000000e+00> : vector<1xf32>
      %125 = vector.multi_reduction <add>, %124, %cst_34 [1] : vector<1x16xf32> to vector<1xf32>
      %126 = vector.shape_cast %125 : vector<1xf32> to vector<1x1xf32>
      %127 = tpu.reciprocal %126 {approx = true} : vector<1x1xf32> -> vector<1x1xf32>
      %128 = vector.broadcast %127 : vector<1x1xf32> to vector<1x16xf32>
      %129 = arith.mulf %124, %128 : vector<1x16xf32>
      %130 = arith.truncf %129 : vector<1x16xf32> to vector<1x16xbf16>
      %cst_35 = arith.constant dense<0.000000e+00> : vector<1x16xf32>
      %131 = tpu.matmul %130, %37, %cst_35 {dimension_numbers = #tpu.dot_dimension_numbers<[1], [0], [0], [1], [0, 0, 1, 1], [], []>} : vector<1x16xbf16>, vector<16x16xbf16>, vector<1x16xf32> -> vector<1x16xf32>
      %cst_36 = arith.constant 9.99999996E-13 : f32
      %132 = vector.broadcast %cst_36 : f32 to vector<1x16xf32>
      %133 = arith.maximumf %129, %132 : vector<1x16xf32>
      %134 = tpu.reciprocal %133 {approx = true} : vector<1x16xf32> -> vector<1x16xf32>
      %135 = arith.mulf %36, %134 : vector<1x16xf32>
      %136 = arith.addf %131, %135 : vector<1x16xf32>
      %137 = math.exp2 %136 : vector<1x16xf32>
      %138 = arith.mulf %129, %137 : vector<1x16xf32>
      %cst_37 = arith.constant dense<0.000000e+00> : vector<1xf32>
      %139 = vector.multi_reduction <add>, %138, %cst_37 [1] : vector<1x16xf32> to vector<1xf32>
      %140 = vector.shape_cast %139 : vector<1xf32> to vector<1x1xf32>
      %141 = tpu.reciprocal %140 {approx = true} : vector<1x1xf32> -> vector<1x1xf32>
      %142 = vector.broadcast %141 : vector<1x1xf32> to vector<1x16xf32>
      %143 = arith.mulf %138, %142 : vector<1x16xf32>
      %144 = arith.truncf %143 : vector<1x16xf32> to vector<1x16xbf16>
      %cst_38 = arith.constant dense<0.000000e+00> : vector<1x16xf32>
      %145 = tpu.matmul %144, %37, %cst_38 {dimension_numbers = #tpu.dot_dimension_numbers<[1], [0], [0], [1], [0, 0, 1, 1], [], []>} : vector<1x16xbf16>, vector<16x16xbf16>, vector<1x16xf32> -> vector<1x16xf32>
      %cst_39 = arith.constant 9.99999996E-13 : f32
      %146 = vector.broadcast %cst_39 : f32 to vector<1x16xf32>
      %147 = arith.maximumf %143, %146 : vector<1x16xf32>
      %148 = tpu.reciprocal %147 {approx = true} : vector<1x16xf32> -> vector<1x16xf32>
      %149 = arith.mulf %36, %148 : vector<1x16xf32>
      %150 = arith.addf %145, %149 : vector<1x16xf32>
      %151 = math.exp2 %150 : vector<1x16xf32>
      %152 = arith.mulf %143, %151 : vector<1x16xf32>
      %cst_40 = arith.constant dense<0.000000e+00> : vector<1xf32>
      %153 = vector.multi_reduction <add>, %152, %cst_40 [1] : vector<1x16xf32> to vector<1xf32>
      %154 = vector.shape_cast %153 : vector<1xf32> to vector<1x1xf32>
      %155 = tpu.reciprocal %154 {approx = true} : vector<1x1xf32> -> vector<1x1xf32>
      %156 = vector.broadcast %155 : vector<1x1xf32> to vector<1x16xf32>
      %157 = arith.mulf %152, %156 : vector<1x16xf32>
      %158 = arith.truncf %157 : vector<1x16xf32> to vector<1x16xbf16>
      %cst_41 = arith.constant dense<0.000000e+00> : vector<1x16xf32>
      %159 = tpu.matmul %158, %37, %cst_41 {dimension_numbers = #tpu.dot_dimension_numbers<[1], [0], [0], [1], [0, 0, 1, 1], [], []>} : vector<1x16xbf16>, vector<16x16xbf16>, vector<1x16xf32> -> vector<1x16xf32>
      %cst_42 = arith.constant 9.99999996E-13 : f32
      %160 = vector.broadcast %cst_42 : f32 to vector<1x16xf32>
      %161 = arith.maximumf %157, %160 : vector<1x16xf32>
      %162 = tpu.reciprocal %161 {approx = true} : vector<1x16xf32> -> vector<1x16xf32>
      %163 = arith.mulf %36, %162 : vector<1x16xf32>
      %164 = arith.addf %159, %163 : vector<1x16xf32>
      %165 = math.exp2 %164 : vector<1x16xf32>
      %166 = arith.mulf %157, %165 : vector<1x16xf32>
      %cst_43 = arith.constant dense<0.000000e+00> : vector<1xf32>
      %167 = vector.multi_reduction <add>, %166, %cst_43 [1] : vector<1x16xf32> to vector<1xf32>
      %168 = vector.shape_cast %167 : vector<1xf32> to vector<1x1xf32>
      %169 = tpu.reciprocal %168 {approx = true} : vector<1x1xf32> -> vector<1x1xf32>
      %170 = vector.broadcast %169 : vector<1x1xf32> to vector<1x16xf32>
      %171 = arith.mulf %166, %170 : vector<1x16xf32>
      %172 = arith.truncf %171 : vector<1x16xf32> to vector<1x16xbf16>
      %cst_44 = arith.constant dense<0.000000e+00> : vector<1x16xf32>
      %173 = tpu.matmul %172, %37, %cst_44 {dimension_numbers = #tpu.dot_dimension_numbers<[1], [0], [0], [1], [0, 0, 1, 1], [], []>} : vector<1x16xbf16>, vector<16x16xbf16>, vector<1x16xf32> -> vector<1x16xf32>
      %cst_45 = arith.constant 9.99999996E-13 : f32
      %174 = vector.broadcast %cst_45 : f32 to vector<1x16xf32>
      %175 = arith.maximumf %171, %174 : vector<1x16xf32>
      %176 = tpu.reciprocal %175 {approx = true} : vector<1x16xf32> -> vector<1x16xf32>
      %177 = arith.mulf %36, %176 : vector<1x16xf32>
      %178 = arith.addf %173, %177 : vector<1x16xf32>
      %179 = math.exp2 %178 : vector<1x16xf32>
      %180 = arith.mulf %171, %179 : vector<1x16xf32>
      %cst_46 = arith.constant dense<0.000000e+00> : vector<1xf32>
      %181 = vector.multi_reduction <add>, %180, %cst_46 [1] : vector<1x16xf32> to vector<1xf32>
      %182 = vector.shape_cast %181 : vector<1xf32> to vector<1x1xf32>
      %183 = tpu.reciprocal %182 {approx = true} : vector<1x1xf32> -> vector<1x1xf32>
      %184 = vector.broadcast %183 : vector<1x1xf32> to vector<1x16xf32>
      %185 = arith.mulf %180, %184 : vector<1x16xf32>
      %186 = arith.truncf %185 : vector<1x16xf32> to vector<1x16xbf16>
      %cst_47 = arith.constant dense<0.000000e+00> : vector<1x16xf32>
      %187 = tpu.matmul %186, %37, %cst_47 {dimension_numbers = #tpu.dot_dimension_numbers<[1], [0], [0], [1], [0, 0, 1, 1], [], []>} : vector<1x16xbf16>, vector<16x16xbf16>, vector<1x16xf32> -> vector<1x16xf32>
      %cst_48 = arith.constant 9.99999996E-13 : f32
      %188 = vector.broadcast %cst_48 : f32 to vector<1x16xf32>
      %189 = arith.maximumf %185, %188 : vector<1x16xf32>
      %190 = tpu.reciprocal %189 {approx = true} : vector<1x16xf32> -> vector<1x16xf32>
      %191 = arith.mulf %36, %190 : vector<1x16xf32>
      %192 = arith.addf %187, %191 : vector<1x16xf32>
      %193 = math.exp2 %192 : vector<1x16xf32>
      %194 = arith.mulf %185, %193 : vector<1x16xf32>
      %cst_49 = arith.constant dense<0.000000e+00> : vector<1xf32>
      %195 = vector.multi_reduction <add>, %194, %cst_49 [1] : vector<1x16xf32> to vector<1xf32>
      %196 = vector.shape_cast %195 : vector<1xf32> to vector<1x1xf32>
      %197 = tpu.reciprocal %196 {approx = true} : vector<1x1xf32> -> vector<1x1xf32>
      %198 = vector.broadcast %197 : vector<1x1xf32> to vector<1x16xf32>
      %199 = arith.mulf %194, %198 : vector<1x16xf32>
      %200 = arith.truncf %199 : vector<1x16xf32> to vector<1x16xbf16>
      %cst_50 = arith.constant dense<0.000000e+00> : vector<1x16xf32>
      %201 = tpu.matmul %200, %37, %cst_50 {dimension_numbers = #tpu.dot_dimension_numbers<[1], [0], [0], [1], [0, 0, 1, 1], [], []>} : vector<1x16xbf16>, vector<16x16xbf16>, vector<1x16xf32> -> vector<1x16xf32>
      %cst_51 = arith.constant 9.99999996E-13 : f32
      %202 = vector.broadcast %cst_51 : f32 to vector<1x16xf32>
      %203 = arith.maximumf %199, %202 : vector<1x16xf32>
      %204 = tpu.reciprocal %203 {approx = true} : vector<1x16xf32> -> vector<1x16xf32>
      %205 = arith.mulf %36, %204 : vector<1x16xf32>
      %206 = arith.addf %201, %205 : vector<1x16xf32>
      %207 = math.exp2 %206 : vector<1x16xf32>
      %208 = arith.mulf %199, %207 : vector<1x16xf32>
      %cst_52 = arith.constant dense<0.000000e+00> : vector<1xf32>
      %209 = vector.multi_reduction <add>, %208, %cst_52 [1] : vector<1x16xf32> to vector<1xf32>
      %210 = vector.shape_cast %209 : vector<1xf32> to vector<1x1xf32>
      %211 = tpu.reciprocal %210 {approx = true} : vector<1x1xf32> -> vector<1x1xf32>
      %212 = vector.broadcast %211 : vector<1x1xf32> to vector<1x16xf32>
      %213 = arith.mulf %208, %212 : vector<1x16xf32>
      %214 = arith.truncf %213 : vector<1x16xf32> to vector<1x16xbf16>
      %cst_53 = arith.constant dense<0.000000e+00> : vector<1x16xf32>
      %215 = tpu.matmul %214, %37, %cst_53 {dimension_numbers = #tpu.dot_dimension_numbers<[1], [0], [0], [1], [0, 0, 1, 1], [], []>} : vector<1x16xbf16>, vector<16x16xbf16>, vector<1x16xf32> -> vector<1x16xf32>
      %cst_54 = arith.constant 9.99999996E-13 : f32
      %216 = vector.broadcast %cst_54 : f32 to vector<1x16xf32>
      %217 = arith.maximumf %213, %216 : vector<1x16xf32>
      %218 = tpu.reciprocal %217 {approx = true} : vector<1x16xf32> -> vector<1x16xf32>
      %219 = arith.mulf %36, %218 : vector<1x16xf32>
      %220 = arith.addf %215, %219 : vector<1x16xf32>
      %221 = math.exp2 %220 : vector<1x16xf32>
      %222 = arith.mulf %213, %221 : vector<1x16xf32>
      %cst_55 = arith.constant dense<0.000000e+00> : vector<1xf32>
      %223 = vector.multi_reduction <add>, %222, %cst_55 [1] : vector<1x16xf32> to vector<1xf32>
      %224 = vector.shape_cast %223 : vector<1xf32> to vector<1x1xf32>
      %225 = tpu.reciprocal %224 {approx = true} : vector<1x1xf32> -> vector<1x1xf32>
      %226 = vector.broadcast %225 : vector<1x1xf32> to vector<1x16xf32>
      %227 = arith.mulf %222, %226 : vector<1x16xf32>
      %228 = arith.truncf %227 : vector<1x16xf32> to vector<1x16xbf16>
      %cst_56 = arith.constant dense<0.000000e+00> : vector<1x16xf32>
      %229 = tpu.matmul %228, %37, %cst_56 {dimension_numbers = #tpu.dot_dimension_numbers<[1], [0], [0], [1], [0, 0, 1, 1], [], []>} : vector<1x16xbf16>, vector<16x16xbf16>, vector<1x16xf32> -> vector<1x16xf32>
      %cst_57 = arith.constant 9.99999996E-13 : f32
      %230 = vector.broadcast %cst_57 : f32 to vector<1x16xf32>
      %231 = arith.maximumf %227, %230 : vector<1x16xf32>
      %232 = tpu.reciprocal %231 {approx = true} : vector<1x16xf32> -> vector<1x16xf32>
      %233 = arith.mulf %36, %232 : vector<1x16xf32>
      %234 = arith.addf %229, %233 : vector<1x16xf32>
      %235 = math.exp2 %234 : vector<1x16xf32>
      %236 = arith.mulf %227, %235 : vector<1x16xf32>
      %cst_58 = arith.constant dense<0.000000e+00> : vector<1xf32>
      %237 = vector.multi_reduction <add>, %236, %cst_58 [1] : vector<1x16xf32> to vector<1xf32>
      %238 = vector.shape_cast %237 : vector<1xf32> to vector<1x1xf32>
      %239 = tpu.reciprocal %238 {approx = true} : vector<1x1xf32> -> vector<1x1xf32>
      %240 = vector.broadcast %239 : vector<1x1xf32> to vector<1x16xf32>
      %241 = arith.mulf %236, %240 : vector<1x16xf32>
      %242 = arith.truncf %241 : vector<1x16xf32> to vector<1x16xbf16>
      %cst_59 = arith.constant dense<0.000000e+00> : vector<1x16xf32>
      %243 = tpu.matmul %242, %37, %cst_59 {dimension_numbers = #tpu.dot_dimension_numbers<[1], [0], [0], [1], [0, 0, 1, 1], [], []>} : vector<1x16xbf16>, vector<16x16xbf16>, vector<1x16xf32> -> vector<1x16xf32>
      %cst_60 = arith.constant 9.99999996E-13 : f32
      %244 = vector.broadcast %cst_60 : f32 to vector<1x16xf32>
      %245 = arith.maximumf %241, %244 : vector<1x16xf32>
      %246 = tpu.reciprocal %245 {approx = true} : vector<1x16xf32> -> vector<1x16xf32>
      %247 = arith.mulf %36, %246 : vector<1x16xf32>
      %248 = arith.addf %243, %247 : vector<1x16xf32>
      %249 = math.exp2 %248 : vector<1x16xf32>
      %250 = arith.mulf %241, %249 : vector<1x16xf32>
      %cst_61 = arith.constant dense<0.000000e+00> : vector<1xf32>
      %251 = vector.multi_reduction <add>, %250, %cst_61 [1] : vector<1x16xf32> to vector<1xf32>
      %252 = vector.shape_cast %251 : vector<1xf32> to vector<1x1xf32>
      %253 = tpu.reciprocal %252 {approx = true} : vector<1x1xf32> -> vector<1x1xf32>
      %254 = vector.broadcast %253 : vector<1x1xf32> to vector<1x16xf32>
      %255 = arith.mulf %250, %254 : vector<1x16xf32>
      %256 = arith.truncf %255 : vector<1x16xf32> to vector<1x16xbf16>
      %cst_62 = arith.constant dense<0.000000e+00> : vector<1x16xf32>
      %257 = tpu.matmul %256, %37, %cst_62 {dimension_numbers = #tpu.dot_dimension_numbers<[1], [0], [0], [1], [0, 0, 1, 1], [], []>} : vector<1x16xbf16>, vector<16x16xbf16>, vector<1x16xf32> -> vector<1x16xf32>
      %cst_63 = arith.constant 9.99999996E-13 : f32
      %258 = vector.broadcast %cst_63 : f32 to vector<1x16xf32>
      %259 = arith.maximumf %255, %258 : vector<1x16xf32>
      %260 = tpu.reciprocal %259 {approx = true} : vector<1x16xf32> -> vector<1x16xf32>
      %261 = arith.mulf %36, %260 : vector<1x16xf32>
      %262 = arith.addf %257, %261 : vector<1x16xf32>
      %263 = math.exp2 %262 : vector<1x16xf32>
      %264 = arith.mulf %255, %263 : vector<1x16xf32>
      %cst_64 = arith.constant dense<0.000000e+00> : vector<1xf32>
      %265 = vector.multi_reduction <add>, %264, %cst_64 [1] : vector<1x16xf32> to vector<1xf32>
      %266 = vector.shape_cast %265 : vector<1xf32> to vector<1x1xf32>
      %267 = tpu.reciprocal %266 {approx = true} : vector<1x1xf32> -> vector<1x1xf32>
      %268 = vector.broadcast %267 : vector<1x1xf32> to vector<1x16xf32>
      %269 = arith.mulf %264, %268 : vector<1x16xf32>
      %270 = arith.truncf %269 : vector<1x16xf32> to vector<1x16xbf16>
      %cst_65 = arith.constant dense<0.000000e+00> : vector<1x16xf32>
      %271 = tpu.matmul %270, %37, %cst_65 {dimension_numbers = #tpu.dot_dimension_numbers<[1], [0], [0], [1], [0, 0, 1, 1], [], []>} : vector<1x16xbf16>, vector<16x16xbf16>, vector<1x16xf32> -> vector<1x16xf32>
      %cst_66 = arith.constant 9.99999996E-13 : f32
      %272 = vector.broadcast %cst_66 : f32 to vector<1x16xf32>
      %273 = arith.maximumf %269, %272 : vector<1x16xf32>
      %274 = tpu.reciprocal %273 {approx = true} : vector<1x16xf32> -> vector<1x16xf32>
      %275 = arith.mulf %36, %274 : vector<1x16xf32>
      %276 = arith.addf %271, %275 : vector<1x16xf32>
      %277 = math.exp2 %276 : vector<1x16xf32>
      %278 = arith.mulf %269, %277 : vector<1x16xf32>
      %cst_67 = arith.constant dense<0.000000e+00> : vector<1xf32>
      %279 = vector.multi_reduction <add>, %278, %cst_67 [1] : vector<1x16xf32> to vector<1xf32>
      %280 = vector.shape_cast %279 : vector<1xf32> to vector<1x1xf32>
      %281 = tpu.reciprocal %280 {approx = true} : vector<1x1xf32> -> vector<1x1xf32>
      %282 = vector.broadcast %281 : vector<1x1xf32> to vector<1x16xf32>
      %283 = arith.mulf %278, %282 : vector<1x16xf32>
      %284 = arith.truncf %283 : vector<1x16xf32> to vector<1x16xbf16>
      %cst_68 = arith.constant dense<0.000000e+00> : vector<1x16xf32>
      %285 = tpu.matmul %284, %37, %cst_68 {dimension_numbers = #tpu.dot_dimension_numbers<[1], [0], [0], [1], [0, 0, 1, 1], [], []>} : vector<1x16xbf16>, vector<16x16xbf16>, vector<1x16xf32> -> vector<1x16xf32>
      %cst_69 = arith.constant 9.99999996E-13 : f32
      %286 = vector.broadcast %cst_69 : f32 to vector<1x16xf32>
      %287 = arith.maximumf %283, %286 : vector<1x16xf32>
      %288 = tpu.reciprocal %287 {approx = true} : vector<1x16xf32> -> vector<1x16xf32>
      %289 = arith.mulf %36, %288 : vector<1x16xf32>
      %290 = arith.addf %285, %289 : vector<1x16xf32>
      %291 = math.exp2 %290 : vector<1x16xf32>
      %292 = arith.mulf %283, %291 : vector<1x16xf32>
      %cst_70 = arith.constant dense<0.000000e+00> : vector<1xf32>
      %293 = vector.multi_reduction <add>, %292, %cst_70 [1] : vector<1x16xf32> to vector<1xf32>
      %294 = vector.shape_cast %293 : vector<1xf32> to vector<1x1xf32>
      %295 = tpu.reciprocal %294 {approx = true} : vector<1x1xf32> -> vector<1x1xf32>
      %296 = vector.broadcast %295 : vector<1x1xf32> to vector<1x16xf32>
      %297 = arith.mulf %292, %296 : vector<1x16xf32>
      %298 = arith.truncf %297 : vector<1x16xf32> to vector<1x16xbf16>
      %cst_71 = arith.constant dense<0.000000e+00> : vector<1x16xf32>
      %299 = tpu.matmul %298, %37, %cst_71 {dimension_numbers = #tpu.dot_dimension_numbers<[1], [0], [0], [1], [0, 0, 1, 1], [], []>} : vector<1x16xbf16>, vector<16x16xbf16>, vector<1x16xf32> -> vector<1x16xf32>
      %cst_72 = arith.constant 9.99999996E-13 : f32
      %300 = vector.broadcast %cst_72 : f32 to vector<1x16xf32>
      %301 = arith.maximumf %297, %300 : vector<1x16xf32>
      %302 = tpu.reciprocal %301 {approx = true} : vector<1x16xf32> -> vector<1x16xf32>
      %303 = arith.mulf %36, %302 : vector<1x16xf32>
      %304 = arith.addf %299, %303 : vector<1x16xf32>
      %305 = math.exp2 %304 : vector<1x16xf32>
      %306 = arith.mulf %297, %305 : vector<1x16xf32>
      %cst_73 = arith.constant dense<0.000000e+00> : vector<1xf32>
      %307 = vector.multi_reduction <add>, %306, %cst_73 [1] : vector<1x16xf32> to vector<1xf32>
      %308 = vector.shape_cast %307 : vector<1xf32> to vector<1x1xf32>
      %309 = tpu.reciprocal %308 {approx = true} : vector<1x1xf32> -> vector<1x1xf32>
      %310 = vector.broadcast %309 : vector<1x1xf32> to vector<1x16xf32>
      %311 = arith.mulf %306, %310 : vector<1x16xf32>
      %312 = arith.truncf %311 : vector<1x16xf32> to vector<1x16xbf16>
      %cst_74 = arith.constant dense<0.000000e+00> : vector<1x16xf32>
      %313 = tpu.matmul %312, %37, %cst_74 {dimension_numbers = #tpu.dot_dimension_numbers<[1], [0], [0], [1], [0, 0, 1, 1], [], []>} : vector<1x16xbf16>, vector<16x16xbf16>, vector<1x16xf32> -> vector<1x16xf32>
      %cst_75 = arith.constant 9.99999996E-13 : f32
      %314 = vector.broadcast %cst_75 : f32 to vector<1x16xf32>
      %315 = arith.maximumf %311, %314 : vector<1x16xf32>
      %316 = tpu.reciprocal %315 {approx = true} : vector<1x16xf32> -> vector<1x16xf32>
      %317 = arith.mulf %36, %316 : vector<1x16xf32>
      %318 = arith.addf %313, %317 : vector<1x16xf32>
      %319 = math.exp2 %318 : vector<1x16xf32>
      %320 = arith.mulf %311, %319 : vector<1x16xf32>
      %cst_76 = arith.constant dense<0.000000e+00> : vector<1xf32>
      %321 = vector.multi_reduction <add>, %320, %cst_76 [1] : vector<1x16xf32> to vector<1xf32>
      %322 = vector.shape_cast %321 : vector<1xf32> to vector<1x1xf32>
      %323 = tpu.reciprocal %322 {approx = true} : vector<1x1xf32> -> vector<1x1xf32>
      %324 = vector.broadcast %323 : vector<1x1xf32> to vector<1x16xf32>
      %325 = arith.mulf %320, %324 : vector<1x16xf32>
      scf.yield %325 : vector<1x16xf32>
    }
    %cst_14 = arith.constant dense<0.000000e+00> : vector<1xf32>
    %41 = vector.multi_reduction <add>, %40, %cst_14 [1] : vector<1x16xf32> to vector<1xf32>
    %42 = vector.shape_cast %41 : vector<1xf32> to vector<1x1xf32>
    %43 = vector.broadcast %42 : vector<1x1xf32> to vector<1x16xf32>
    %44 = arith.divf %40, %43 : vector<1x16xf32>
    %c0_15 = arith.constant 0 : index
    %c0_16 = arith.constant 0 : index
    %45 = vector.load %arg3[%c0_15, %c0_16] : memref<1x16xf32, #tpu.memory_space<vmem>>, vector<1x16xf32>
    tpu.vector_store %arg3[%c0_15, %c0_16], %44 {strides = array<i32>} : memref<1x16xf32, #tpu.memory_space<vmem>>, vector<1x16xf32>,
    return
  }
  func.func @transform_0(%arg0: i32) -> (i32, i32) {
    %c0_i32 = arith.constant 0 : i32
    %c0_i32_0 = arith.constant 0 : i32
    %c0_i32_1 = arith.constant 0 : i32
    return %c0_i32, %c0_i32_0 : i32, i32
  }
  func.func @transform_1(%arg0: i32) -> (i32, i32) {
    %c0_i32 = arith.constant 0 : i32
    %c0_i32_0 = arith.constant 0 : i32
    %c0_i32_1 = arith.constant 0 : i32
    return %c0_i32, %c0_i32_0 : i32, i32
  }
  func.func @transform_2(%arg0: i32) -> (i32, i32) {
    %c0_i32 = arith.constant 0 : i32
    %c0_i32_0 = arith.constant 0 : i32
    %c0_i32_1 = arith.constant 0 : i32
    return %c0_i32, %c0_i32_0 : i32, i32
  }
}

</mosaic_0001>

<llo_original>
// kernel: tpu_custom_call.1
$region0: #{tpu_custom_call.1}
  #allocation0 [shape = 'u32[]', space=smem, size = 0x4, offset = 0x4, fixed_abs, tag = 'smem constant byte address 0x4 - core index']
  #allocation1 [shape = 'u32[144,128]{1,0:T(1,128)}', space=vmem, size = 0x12000, scoped, tag = 'internal scratch']
  %s0 = inlined_call_operand.hbm [shape: f32[16,16], index: 0, kind: input, shape index: {}]
  %s1 = inlined_call_operand.vmem [shape: f32[1,16], index: 1, kind: input, shape index: {}]
  %s2 = inlined_call_operand.hbm [shape: f32[1,16], index: 2, kind: output, shape index: {}]
  %s3 = sld [smem:[#allocation0]]
  $region29: #{tpu_custom_call.1} parent=0
    _
  %s5 = ssub.s32 1, %s3
  %s6 = scalar_select 0, %s5, %s3
  $region1: #{tpu_custom_call.1} parent=0
    #allocation2 [shape = 'u8[8192]{0}', space=vmem, size = 0x2000, scoped, tag = 'input window, operand 0, single buffered']
    #allocation3 [shape = 's32[1]{0}', space=sflag, size = 0x4, scoped, tag = 'scoped memory for tpu_custom_call.1']
    #allocation4 [shape = 's32[1]{0}', space=sflag, size = 0x4, scoped, tag = 'scoped memory for tpu_custom_call.1']
    #allocation5 [shape = 'u8[512]{0}', space=vmem, size = 0x400, scoped, tag = 'output window, operand 0, single buffered']
    %7 = vsyncpa [#allocation3], 0
    %8 = vsyncpa [#allocation4], 0
    // Predicated region
    $region2: #{tpu_custom_call.1} parent=1 // pred_check
      _
    $region3: #{tpu_custom_call.1} parent=1 // pred_check_branch
      %10 = sbr.rel (0) target = $region5
    $region4: #{tpu_custom_call.1} parent=1 // pred_region
      %s12 = ssub.s32 256, 256
      %13 = vsyncadd [#allocation3], %s12
      %s14 = sshll.u32 [#allocation2], 4
      %s15 = int_to_ptr.vmem [resolvable:$true] %s14
      %20 = dma.hbm_to_vmem [thread:$0]  %s0, 256, %s15, [#allocation3], 128, 128, 8
    $region5: #{tpu_custom_call.1} parent=1 // pred_fallthru
      _
    // Predicated region
    $region6: #{tpu_custom_call.1} parent=1 // pred_check
      _
    $region7: #{tpu_custom_call.1} parent=1 // pred_check_branch
      %22 = sbr.rel (0) target = $region9
    $region8: #{tpu_custom_call.1} parent=1 // pred_region
      _
    $region9: #{tpu_custom_call.1} parent=1 // pred_fallthru
      _
    // Predicated region
    $region10: #{tpu_custom_call.1} parent=1 // pred_check
      _
    $region11: #{tpu_custom_call.1} parent=1 // pred_check_branch
      %24 = sbr.rel (0) target = $region13
    $region12: #{tpu_custom_call.1} parent=1 // pred_region
      %25 = dma.done [#allocation3], 256
    $region13: #{tpu_custom_call.1} parent=1 // pred_fallthru
      _
    %v27 = vld [vmem:[#allocation2] sm:$0xff]
    %v28 = vld [vmem:[#allocation2 + $0x8] sm:$0xff]
    %vm29 = vcmask 130048
    %v31 = vsel %vm29, %v27, 0
    %v34 = vsel %vm29, %v28, 0
    %36 = vmatprep.subr.mxu0 0.0
    %37 = vmatpush1.xpose.msra.mxu0 %v31
    %38 = vmatprep.subr.mxu0 0.0
    %39 = vmatpush1.xpose.msra.mxu0 %v34
    %40 = vmatprep.subr.mxu0 0.0
    %41 = vmatpush1.xpose.msra.mxu0 0.0
    %42 = vmatprep.subr.mxu0 0.0
    %43 = vmatpush1.xpose.msra.mxu0 0.0
    %44 = vmatprep.subr.mxu0 0.0
    %45 = vmatpush1.xpose.msra.mxu0 0.0
    %46 = vmatprep.subr.mxu0 0.0
    %47 = vmatpush1.xpose.msra.mxu0 0.0
    %48 = vmatprep.subr.mxu0 0.0
    %49 = vmatpush1.xpose.msra.mxu0 0.0
    %50 = vmatprep.subr.mxu0 0.0
    %51 = vmatpush1.xpose.msra.mxu0 0.0
    %52 = vmatprep.subr.mxu0 0.0
    %53 = vmatpush1.xpose.msra.mxu0 0.0
    %54 = vmatprep.subr.mxu0 0.0
    %55 = vmatpush1.xpose.msra.mxu0 0.0
    %56 = vmatprep.subr.mxu0 0.0
    %57 = vmatpush1.xpose.msra.mxu0 0.0
    %58 = vmatprep.subr.mxu0 0.0
    %59 = vmatpush1.xpose.msra.mxu0 0.0
    %60 = vmatprep.subr.mxu0 0.0
    %61 = vmatpush1.xpose.msra.mxu0 0.0
    %62 = vmatprep.subr.mxu0 0.0
    %63 = vmatpush1.xpose.msra.mxu0 0.0
    %64 = vmatprep.subr.mxu0 0.0
    %65 = vmatpush1.xpose.msra.mxu0 0.0
    %66 = vmatprep.subr.mxu0 0.0
    %67 = vmatpush1.xpose.msra.mxu0 0.0
    %68 = vmatprep.subr.mxu0 0.0
    %69 = vmatpush1.xpose.msra.mxu0 0.0
    %70 = vmatprep.subr.mxu0 0.0
    %71 = vmatpush1.xpose.msra.mxu0 0.0
    %72 = vmatprep.subr.mxu0 0.0
    %73 = vmatpush1.xpose.msra.mxu0 0.0
    %74 = vmatprep.subr.mxu0 0.0
    %75 = vmatpush1.xpose.msra.mxu0 0.0
    %76 = vmatprep.subr.mxu0 0.0
    %77 = vmatpush1.xpose.msra.mxu0 0.0
    %78 = vmatprep.subr.mxu0 0.0
    %79 = vmatpush1.xpose.msra.mxu0 0.0
    %80 = vmatprep.subr.mxu0 0.0
    %81 = vmatpush1.xpose.msra.mxu0 0.0
    %82 = vmatprep.subr.mxu0 0.0
    %83 = vmatpush1.xpose.msra.mxu0 0.0
    %84 = vmatprep.subr.mxu0 0.0
    %85 = vmatpush1.xpose.msra.mxu0 0.0
    %86 = vmatprep.subr.mxu0 0.0
    %87 = vmatpush1.xpose.msra.mxu0 0.0
    %88 = vmatprep.subr.mxu0 0.0
    %89 = vmatpush1.xpose.msra.mxu0 0.0
    %90 = vmatprep.subr.mxu0 0.0
    %91 = vmatpush1.xpose.msra.mxu0 0.0
    %92 = vmatprep.subr.mxu0 0.0
    %93 = vmatpush1.xpose.msra.mxu0 0.0
    %94 = vmatprep.subr.mxu0 0.0
    %95 = vmatpush1.xpose.msra.mxu0 0.0
    %96 = vmatprep.subr.mxu0 0.0
    %97 = vmatpush1.xpose.msra.mxu0 0.0
    %98 = vmatprep.subr.mxu0 0.0
    %99 = vmatpush1.xpose.msra.mxu0 0.0
    %100 = vmatprep.mubr.f32.mxu0 0.0
    %101 = vmatmul.mubr.f32.gmra.mrb[0].mxu0 %v31
    %v102 = vpop.f32.mrb[0].mxu0
    %v103 = vadd.f32 0.0, %v102
    %v104 = vpop.f32.mrb[0].mxu0
    %105 = vmatprep.mubr.f32.mxu0 0.0
    %106 = vmatmul.mubr.f32.gmra.mrb[0].mxu0 %v34
    %v107 = vpop.f32.mrb[0].mxu0
    %v108 = vadd.f32 0.0, %v107
    %v109 = vpop.f32.mrb[0].mxu0
    %110 = vdwg.mxu0
    %111 = vxpose.xlu0.b32.start [1/16] %v103, 128
    %112 = vxpose.xlu0.b32.cont [2/16] %v108, 128
    %113 = vxpose.xlu0.b32.cont [3/16] 0.0, 128
    %114 = vxpose.xlu0.b32.cont [4/16] 0.0, 128
    %115 = vxpose.xlu0.b32.cont [5/16] 0.0, 128
    %116 = vxpose.xlu0.b32.cont [6/16] 0.0, 128
    %117 = vxpose.xlu0.b32.cont [7/16] 0.0, 128
    %118 = vxpose.xlu0.b32.cont [8/16] 0.0, 128
    %119 = vxpose.xlu0.b32.cont [9/16] 0.0, 128
    %120 = vxpose.xlu0.b32.cont [10/16] 0.0, 128
    %121 = vxpose.xlu0.b32.cont [11/16] 0.0, 128
    %122 = vxpose.xlu0.b32.cont [12/16] 0.0, 128
    %123 = vxpose.xlu0.b32.cont [13/16] 0.0, 128
    %124 = vxpose.xlu0.b32.cont [14/16] 0.0, 128
    %125 = vxpose.xlu0.b32.cont [15/16] 0.0, 128
    %126 = vxpose.xlu0.b32.end [16/16] 0.0, 128
    %v127 = vpop.trf.xlu0
    %v128 = vpop.trf.xlu0
    %v129 = vpop.trf.xlu0
    %v130 = vpop.trf.xlu0
    %v131 = vpop.trf.xlu0
    %v132 = vpop.trf.xlu0
    %v133 = vpop.trf.xlu0
    %v134 = vpop.trf.xlu0
    %v135 = vpop.trf.xlu0
    %v136 = vpop.trf.xlu0
    %v137 = vpop.trf.xlu0
    %v138 = vpop.trf.xlu0
    %v139 = vpop.trf.xlu0
    %v140 = vpop.trf.xlu0
    %v141 = vpop.trf.xlu0
    %v142 = vpop.trf.xlu0
    %v144 = vsel %vm29, %v127, 0
    %v147 = vsel %vm29, %v128, 0
    %149 = vmatprep.subr.mxu0 0.0
    %150 = vmatpush1.msra.mxu0 %v103
    %151 = vmatprep.subr.mxu0 0.0
    %152 = vmatpush1.msra.mxu0 %v108
    %153 = vmatprep.subr.mxu0 0.0
    %154 = vmatpush1.msra.mxu0 0.0
    %155 = vmatprep.subr.mxu0 0.0
    %156 = vmatpush1.msra.mxu0 0.0
    %157 = vmatprep.subr.mxu0 0.0
    %158 = vmatpush1.msra.mxu0 0.0
    %159 = vmatprep.subr.mxu0 0.0
    %160 = vmatpush1.msra.mxu0 0.0
    %161 = vmatprep.subr.mxu0 0.0
    %162 = vmatpush1.msra.mxu0 0.0
    %163 = vmatprep.subr.mxu0 0.0
    %164 = vmatpush1.msra.mxu0 0.0
    %165 = vmatprep.subr.mxu0 0.0
    %166 = vmatpush1.msra.mxu0 0.0
    %167 = vmatprep.subr.mxu0 0.0
    %168 = vmatpush1.msra.mxu0 0.0
    %169 = vmatprep.subr.mxu0 0.0
    %170 = vmatpush1.msra.mxu0 0.0
    %171 = vmatprep.subr.mxu0 0.0
    %172 = vmatpush1.msra.mxu0 0.0
    %173 = vmatprep.subr.mxu0 0.0
    %174 = vmatpush1.msra.mxu0 0.0
    %175 = vmatprep.subr.mxu0 0.0
    %176 = vmatpush1.msra.mxu0 0.0
    %177 = vmatprep.subr.mxu0 0.0
    %178 = vmatpush1.msra.mxu0 0.0
    %179 = vmatprep.subr.mxu0 0.0
    %180 = vmatpush1.msra.mxu0 0.0
    %181 = vmatprep.subr.mxu0 0.0
    %182 = vmatpush1.msra.mxu0 0.0
    %183 = vmatprep.subr.mxu0 0.0
    %184 = vmatpush1.msra.mxu0 0.0
    %185 = vmatprep.subr.mxu0 0.0
    %186 = vmatpush1.msra.mxu0 0.0
    %187 = vmatprep.subr.mxu0 0.0
    %188 = vmatpush1.msra.mxu0 0.0
    %189 = vmatprep.subr.mxu0 0.0
    %190 = vmatpush1.msra.mxu0 0.0
    %191 = vmatprep.subr.mxu0 0.0
    %192 = vmatpush1.msra.mxu0 0.0
    %193 = vmatprep.subr.mxu0 0.0
    %194 = vmatpush1.msra.mxu0 0.0
    %195 = vmatprep.subr.mxu0 0.0
    %196 = vmatpush1.msra.mxu0 0.0
    %197 = vmatprep.subr.mxu0 0.0
    %198 = vmatpush1.msra.mxu0 0.0
    %199 = vmatprep.subr.mxu0 0.0
    %200 = vmatpush1.msra.mxu0 0.0
    %201 = vmatprep.subr.mxu0 0.0
    %202 = vmatpush1.msra.mxu0 0.0
    %203 = vmatprep.subr.mxu0 0.0
    %204 = vmatpush1.msra.mxu0 0.0
    %205 = vmatprep.subr.mxu0 0.0
    %206 = vmatpush1.msra.mxu0 0.0
    %207 = vmatprep.subr.mxu0 0.0
    %208 = vmatpush1.msra.mxu0 0.0
    %209 = vmatprep.subr.mxu0 0.0
    %210 = vmatpush1.msra.mxu0 0.0
    %211 = vmatprep.subr.mxu0 0.0
    %212 = vmatpush1.msra.mxu0 0.0
    %213 = vmatprep.mubr.f32.mxu0 0.0
    %214 = vmatmul.mubr.f32.gmra.mrb[0].mxu0 %v144
    %v215 = vpop.f32.mrb[0].mxu0
    %v216 = vadd.f32 0.0, %v215
    %v217 = vpop.f32.mrb[0].mxu0
    %218 = vmatprep.mubr.f32.mxu0 0.0
    %219 = vmatmul.mubr.f32.gmra.mrb[0].mxu0 %v147
    %v220 = vpop.f32.mrb[0].mxu0
    %v221 = vadd.f32 0.0, %v220
    %v222 = vpop.f32.mrb[0].mxu0
    %223 = vdwg.mxu0
    %v224 = vld [vmem:[%s1] sm:$0x1]
    %v225 = vmax.f32 %v224, 0.0
    %vm226 = vcmask 122880
    %v227 = vsel %vm226, %v225, 0.0
    %228 = vadd.xlane.f32.xlu0 %v227
    %v229 = vpop.xlane.xlu0 %228
    %v230 = vrot.slane %v229, 4
    %v231 = vadd.f32 %v229, %v230
    %v232 = vrot.slane %v231, 2
    %v233 = vadd.f32 %v231, %v232
    %v234 = vrot.slane %v233, 1
    %v235 = vadd.f32 %v233, %v234
    %s236 = vtos %v235
    %v237 = vstv %s236
    %vm238 = vcmp.gt.f32.partialorder %v237, 0.0
    %v239 = vrcp.pop %v237
    %v240 = vmul.f32 %v225, %v239
    %v241 = vsel %vm238, 1, 0
    %vm242 = vcmp.eq.s32.totalorder %v241, 1
    %v243 = vsel %vm242, %v240, 0.0625
    %v244 = vmul.f32 %v103, %v103
    %v245 = vmul.f32 %v108, %v108
    %v246 = vsel %vm29, %v244, 0.0
    %v247 = vsel %vm29, %v245, 0.0
    %v248 = vadd.f32 %v246, %v247
    %249 = vadd.xlane.f32.xlu0 %v248
    %v250 = vpop.xlane.xlu0 %249
    %v251 = vrot.slane %v250, 4
    %v252 = vadd.f32 %v250, %v251
    %v253 = vrot.slane %v252, 2
    %v254 = vadd.f32 %v252, %v253
    %v255 = vrot.slane %v254, 1
    %v256 = vadd.f32 %v254, %v255
    %s257 = vtos %v256
    %v258 = vstv %s257
    %v259 = vmax.f32 %v258, 1e-30
    %v260 = vrcp.pop %v259
    %v261 = vmul.f32 0.8, %v260
    %v262 = vmul.f32 %v261, -1.442695
    %v263 = vmul.f32 %v262, %v216
    %v264 = vmul.f32 %v262, %v221
    %v265 = vmul.f32 %v261, 1.442695
    %v266 = vmul.f32 %v265, %v243
    %v267 = vpack.c.bf16 %v264, %v263
    loop: start=0, step=1, limit=25
    $region14: #{tpu_custom_call.1} parent=1 // loop_pre_header
      _
    $region15: #{tpu_custom_call.1} parent=1 // loop_header
      %s269 = sphi 0, %s273
      %p270 = scmp.ge.s32.totalorder %s269, 25
      %v274 = vphi 0.0625, %v1354
    $region16: #{tpu_custom_call.1} parent=1 // loop_header_branch
      %272 = sbr.rel (%p270) target = $region20
    $region17: #{tpu_custom_call.1} parent=1 // loop_body
      %v275 = vpack.c.bf16 %v274, %v274
      %v276 = vmax.f32 %v274, 1e-12
      %v277 = vrcp.pop %v276
      %v278 = vmul.f32 %v266, %v277
      %v280 = vsel %vm29, %v275, 0
      %282 = vmatprep.subr.bf16.mxu0 0
      %283 = vmatpush1.bf16.msra.mxu0 %v267
      %284 = vmatprep.subr.bf16.mxu0 0
      %285 = vmatpush1.bf16.msra.mxu0 0
      %286 = vmatprep.subr.bf16.mxu0 0
      %287 = vmatpush1.bf16.msra.mxu0 0
      %288 = vmatprep.subr.bf16.mxu0 0
      %289 = vmatpush1.bf16.msra.mxu0 0
      %290 = vmatprep.subr.bf16.mxu0 0
      %291 = vmatpush1.bf16.msra.mxu0 0
      %292 = vmatprep.subr.bf16.mxu0 0
      %293 = vmatpush1.bf16.msra.mxu0 0
      %294 = vmatprep.subr.bf16.mxu0 0
      %295 = vmatpush1.bf16.msra.mxu0 0
      %296 = vmatprep.subr.bf16.mxu0 0
      %297 = vmatpush1.bf16.msra.mxu0 0
      %298 = vmatprep.subr.bf16.mxu0 0
      %299 = vmatpush1.bf16.msra.mxu0 0
      %300 = vmatprep.subr.bf16.mxu0 0
      %301 = vmatpush1.bf16.msra.mxu0 0
      %302 = vmatprep.subr.bf16.mxu0 0
      %303 = vmatpush1.bf16.msra.mxu0 0
      %304 = vmatprep.subr.bf16.mxu0 0
      %305 = vmatpush1.bf16.msra.mxu0 0
      %306 = vmatprep.subr.bf16.mxu0 0
      %307 = vmatpush1.bf16.msra.mxu0 0
      %308 = vmatprep.subr.bf16.mxu0 0
      %309 = vmatpush1.bf16.msra.mxu0 0
      %310 = vmatprep.subr.bf16.mxu0 0
      %311 = vmatpush1.bf16.msra.mxu0 0
      %312 = vmatprep.subr.bf16.mxu0 0
      %313 = vmatpush1.bf16.msra.mxu0 0
      %314 = vmatprep.mubr.bf16.mxu0 0
      %315 = vmatmul.mubr.bf16.gmra.mrb[0].mxu0 %v280
      %v316 = vpop.f32.mrb[0].mxu0
      %v317 = vadd.f32 %v278, %v316
      %v318 = vpop.f32.mrb[0].mxu0
      %v319 = vpop.f32.mrb[0].mxu0
      %v320 = vpop.f32.mrb[0].mxu0
      %321 = vdwg.mxu0
      %v322 = vpow.pop %v317
      %v323 = vmul.f32 %v274, %v322
      %v324 = vsel %vm226, %v323, 0.0
      %325 = vadd.xlane.f32.xlu0 %v324
      %v326 = vpop.xlane.xlu0 %325
      %v327 = vrcp.pop %v326
      %v328 = vmul.f32 %v323, %v327
      %v329 = vpack.c.bf16 %v328, %v328
      %v330 = vmax.f32 %v328, 1e-12
      %v331 = vrcp.pop %v330
      %v332 = vmul.f32 %v266, %v331
      %v334 = vsel %vm29, %v329, 0
      %336 = vmatprep.subr.bf16.mxu0 0
      %337 = vmatpush1.bf16.msra.mxu0 %v267
      %338 = vmatprep.subr.bf16.mxu0 0
      %339 = vmatpush1.bf16.msra.mxu0 0
      %340 = vmatprep.subr.bf16.mxu0 0
      %341 = vmatpush1.bf16.msra.mxu0 0
      %342 = vmatprep.subr.bf16.mxu0 0
      %343 = vmatpush1.bf16.msra.mxu0 0
      %344 = vmatprep.subr.bf16.mxu0 0
      %345 = vmatpush1.bf16.msra.mxu0 0
      %346 = vmatprep.subr.bf16.mxu0 0
      %347 = vmatpush1.bf16.msra.mxu0 0
      %348 = vmatprep.subr.bf16.mxu0 0
      %349 = vmatpush1.bf16.msra.mxu0 0
      %350 = vmatprep.subr.bf16.mxu0 0
      %351 = vmatpush1.bf16.msra.mxu0 0
      %352 = vmatprep.subr.bf16.mxu0 0
      %353 = vmatpush1.bf16.msra.mxu0 0
      %354 = vmatprep.subr.bf16.mxu0 0
      %355 = vmatpush1.bf16.msra.mxu0 0
      %356 = vmatprep.subr.bf16.mxu0 0
      %357 = vmatpush1.bf16.msra.mxu0 0
      %358 = vmatprep.subr.bf16.mxu0 0
      %359 = vmatpush1.bf16.msra.mxu0 0
      %360 = vmatprep.subr.bf16.mxu0 0
      %361 = vmatpush1.bf16.msra.mxu0 0
      %362 = vmatprep.subr.bf16.mxu0 0
      %363 = vmatpush1.bf16.msra.mxu0 0
      %364 = vmatprep.subr.bf16.mxu0 0
      %365 = vmatpush1.bf16.msra.mxu0 0
      %366 = vmatprep.subr.bf16.mxu0 0
      %367 = vmatpush1.bf16.msra.mxu0 0
      %368 = vmatprep.mubr.bf16.mxu0 0
      %369 = vmatmul.mubr.bf16.gmra.mrb[0].mxu0 %v334
      %v370 = vpop.f32.mrb[0].mxu0
      %v371 = vadd.f32 %v332, %v370
      %v372 = vpop.f32.mrb[0].mxu0
      %v373 = vpop.f32.mrb[0].mxu0
      %v374 = vpop.f32.mrb[0].mxu0
      %375 = vdwg.mxu0
      %v376 = vpow.pop %v371
      %v377 = vmul.f32 %v328, %v376
      %v378 = vsel %vm226, %v377, 0.0
      %379 = vadd.xlane.f32.xlu0 %v378
      %v380 = vpop.xlane.xlu0 %379
      %v381 = vrcp.pop %v380
      %v382 = vmul.f32 %v377, %v381
      %v383 = vpack.c.bf16 %v382, %v382
      %v384 = vmax.f32 %v382, 1e-12
      %v385 = vrcp.pop %v384
      %v386 = vmul.f32 %v266, %v385
      %v388 = vsel %vm29, %v383, 0
      %390 = vmatprep.subr.bf16.mxu0 0
      %391 = vmatpush1.bf16.msra.mxu0 %v267
      %392 = vmatprep.subr.bf16.mxu0 0
      %393 = vmatpush1.bf16.msra.mxu0 0
      %394 = vmatprep.subr.bf16.mxu0 0
      %395 = vmatpush1.bf16.msra.mxu0 0
      %396 = vmatprep.subr.bf16.mxu0 0
      %397 = vmatpush1.bf16.msra.mxu0 0
      %398 = vmatprep.subr.bf16.mxu0 0
      %399 = vmatpush1.bf16.msra.mxu0 0
      %400 = vmatprep.subr.bf16.mxu0 0
      %401 = vmatpush1.bf16.msra.mxu0 0
      %402 = vmatprep.subr.bf16.mxu0 0
      %403 = vmatpush1.bf16.msra.mxu0 0
      %404 = vmatprep.subr.bf16.mxu0 0
      %405 = vmatpush1.bf16.msra.mxu0 0
      %406 = vmatprep.subr.bf16.mxu0 0
      %407 = vmatpush1.bf16.msra.mxu0 0
      %408 = vmatprep.subr.bf16.mxu0 0
      %409 = vmatpush1.bf16.msra.mxu0 0
      %410 = vmatprep.subr.bf16.mxu0 0
      %411 = vmatpush1.bf16.msra.mxu0 0
      %412 = vmatprep.subr.bf16.mxu0 0
      %413 = vmatpush1.bf16.msra.mxu0 0
      %414 = vmatprep.subr.bf16.mxu0 0
      %415 = vmatpush1.bf16.msra.mxu0 0
      %416 = vmatprep.subr.bf16.mxu0 0
      %417 = vmatpush1.bf16.msra.mxu0 0
      %418 = vmatprep.subr.bf16.mxu0 0
      %419 = vmatpush1.bf16.msra.mxu0 0
      %420 = vmatprep.subr.bf16.mxu0 0
      %421 = vmatpush1.bf16.msra.mxu0 0
      %422 = vmatprep.mubr.bf16.mxu0 0
      %423 = vmatmul.mubr.bf16.gmra.mrb[0].mxu0 %v388
      %v424 = vpop.f32.mrb[0].mxu0
      %v425 = vadd.f32 %v386, %v424
      %v426 = vpop.f32.mrb[0].mxu0
      %v427 = vpop.f32.mrb[0].mxu0
      %v428 = vpop.f32.mrb[0].mxu0
      %429 = vdwg.mxu0
      %v430 = vpow.pop %v425
      %v431 = vmul.f32 %v382, %v430
      %v432 = vsel %vm226, %v431, 0.0
      %433 = vadd.xlane.f32.xlu0 %v432
      %v434 = vpop.xlane.xlu0 %433
      %v435 = vrcp.pop %v434
      %v436 = vmul.f32 %v431, %v435
      %v437 = vpack.c.bf16 %v436, %v436
      %v438 = vmax.f32 %v436, 1e-12
      %v439 = vrcp.pop %v438
      %v440 = vmul.f32 %v266, %v439
      %v442 = vsel %vm29, %v437, 0
      %444 = vmatprep.subr.bf16.mxu0 0
      %445 = vmatpush1.bf16.msra.mxu0 %v267
      %446 = vmatprep.subr.bf16.mxu0 0
      %447 = vmatpush1.bf16.msra.mxu0 0
      %448 = vmatprep.subr.bf16.mxu0 0
      %449 = vmatpush1.bf16.msra.mxu0 0
      %450 = vmatprep.subr.bf16.mxu0 0
      %451 = vmatpush1.bf16.msra.mxu0 0
      %452 = vmatprep.subr.bf16.mxu0 0
      %453 = vmatpush1.bf16.msra.mxu0 0
      %454 = vmatprep.subr.bf16.mxu0 0
      %455 = vmatpush1.bf16.msra.mxu0 0
      %456 = vmatprep.subr.bf16.mxu0 0
      %457 = vmatpush1.bf16.msra.mxu0 0
      %458 = vmatprep.subr.bf16.mxu0 0
      %459 = vmatpush1.bf16.msra.mxu0 0
      %460 = vmatprep.subr.bf16.mxu0 0
      %461 = vmatpush1.bf16.msra.mxu0 0
      %462 = vmatprep.subr.bf16.mxu0 0
      %463 = vmatpush1.bf16.msra.mxu0 0
      %464 = vmatprep.subr.bf16.mxu0 0
      %465 = vmatpush1.bf16.msra.mxu0 0
      %466 = vmatprep.subr.bf16.mxu0 0
      %467 = vmatpush1.bf16.msra.mxu0 0
      %468 = vmatprep.subr.bf16.mxu0 0
      %469 = vmatpush1.bf16.msra.mxu0 0
      %470 = vmatprep.subr.bf16.mxu0 0
      %471 = vmatpush1.bf16.msra.mxu0 0
      %472 = vmatprep.subr.bf16.mxu0 0
      %473 = vmatpush1.bf16.msra.mxu0 0
      %474 = vmatprep.subr.bf16.mxu0 0
      %475 = vmatpush1.bf16.msra.mxu0 0
      %476 = vmatprep.mubr.bf16.mxu0 0
      %477 = vmatmul.mubr.bf16.gmra.mrb[0].mxu0 %v442
      %v478 = vpop.f32.mrb[0].mxu0
      %v479 = vadd.f32 %v440, %v478
      %v480 = vpop.f32.mrb[0].mxu0
      %v481 = vpop.f32.mrb[0].mxu0
      %v482 = vpop.f32.mrb[0].mxu0
      %483 = vdwg.mxu0
      %v484 = vpow.pop %v479
      %v485 = vmul.f32 %v436, %v484
      %v486 = vsel %vm226, %v485, 0.0
      %487 = vadd.xlane.f32.xlu0 %v486
      %v488 = vpop.xlane.xlu0 %487
      %v489 = vrcp.pop %v488
      %v490 = vmul.f32 %v485, %v489
      %v491 = vpack.c.bf16 %v490, %v490
      %v492 = vmax.f32 %v490, 1e-12
      %v493 = vrcp.pop %v492
      %v494 = vmul.f32 %v266, %v493
      %v496 = vsel %vm29, %v491, 0
      %498 = vmatprep.subr.bf16.mxu0 0
      %499 = vmatpush1.bf16.msra.mxu0 %v267
      %500 = vmatprep.subr.bf16.mxu0 0
      %501 = vmatpush1.bf16.msra.mxu0 0
      %502 = vmatprep.subr.bf16.mxu0 0
      %503 = vmatpush1.bf16.msra.mxu0 0
      %504 = vmatprep.subr.bf16.mxu0 0
      %505 = vmatpush1.bf16.msra.mxu0 0
      %506 = vmatprep.subr.bf16.mxu0 0
      %507 = vmatpush1.bf16.msra.mxu0 0
      %508 = vmatprep.subr.bf16.mxu0 0
      %509 = vmatpush1.bf16.msra.mxu0 0
      %510 = vmatprep.subr.bf16.mxu0 0
      %511 = vmatpush1.bf16.msra.mxu0 0
      %512 = vmatprep.subr.bf16.mxu0 0
      %513 = vmatpush1.bf16.msra.mxu0 0
      %514 = vmatprep.subr.bf16.mxu0 0
      %515 = vmatpush1.bf16.msra.mxu0 0
      %516 = vmatprep.subr.bf16.mxu0 0
      %517 = vmatpush1.bf16.msra.mxu0 0
      %518 = vmatprep.subr.bf16.mxu0 0
      %519 = vmatpush1.bf16.msra.mxu0 0
      %520 = vmatprep.subr.bf16.mxu0 0
      %521 = vmatpush1.bf16.msra.mxu0 0
      %522 = vmatprep.subr.bf16.mxu0 0
      %523 = vmatpush1.bf16.msra.mxu0 0
      %524 = vmatprep.subr.bf16.mxu0 0
      %525 = vmatpush1.bf16.msra.mxu0 0
      %526 = vmatprep.subr.bf16.mxu0 0
      %527 = vmatpush1.bf16.msra.mxu0 0
      %528 = vmatprep.subr.bf16.mxu0 0
      %529 = vmatpush1.bf16.msra.mxu0 0
      %530 = vmatprep.mubr.bf16.mxu0 0
      %531 = vmatmul.mubr.bf16.gmra.mrb[0].mxu0 %v496
      %v532 = vpop.f32.mrb[0].mxu0
      %v533 = vadd.f32 %v494, %v532
      %v534 = vpop.f32.mrb[0].mxu0
      %v535 = vpop.f32.mrb[0].mxu0
      %v536 = vpop.f32.mrb[0].mxu0
      %537 = vdwg.mxu0
      %v538 = vpow.pop %v533
      %v539 = vmul.f32 %v490, %v538
      %v540 = vsel %vm226, %v539, 0.0
      %541 = vadd.xlane.f32.xlu0 %v540
      %v542 = vpop.xlane.xlu0 %541
      %v543 = vrcp.pop %v542
      %v544 = vmul.f32 %v539, %v543
      %v545 = vpack.c.bf16 %v544, %v544
      %v546 = vmax.f32 %v544, 1e-12
      %v547 = vrcp.pop %v546
      %v548 = vmul.f32 %v266, %v547
      %v550 = vsel %vm29, %v545, 0
      %552 = vmatprep.subr.bf16.mxu0 0
      %553 = vmatpush1.bf16.msra.mxu0 %v267
      %554 = vmatprep.subr.bf16.mxu0 0
      %555 = vmatpush1.bf16.msra.mxu0 0
      %556 = vmatprep.subr.bf16.mxu0 0
      %557 = vmatpush1.bf16.msra.mxu0 0
      %558 = vmatprep.subr.bf16.mxu0 0
      %559 = vmatpush1.bf16.msra.mxu0 0
      %560 = vmatprep.subr.bf16.mxu0 0
      %561 = vmatpush1.bf16.msra.mxu0 0
      %562 = vmatprep.subr.bf16.mxu0 0
      %563 = vmatpush1.bf16.msra.mxu0 0
      %564 = vmatprep.subr.bf16.mxu0 0
      %565 = vmatpush1.bf16.msra.mxu0 0
      %566 = vmatprep.subr.bf16.mxu0 0
      %567 = vmatpush1.bf16.msra.mxu0 0
      %568 = vmatprep.subr.bf16.mxu0 0
      %569 = vmatpush1.bf16.msra.mxu0 0
      %570 = vmatprep.subr.bf16.mxu0 0
      %571 = vmatpush1.bf16.msra.mxu0 0
      %572 = vmatprep.subr.bf16.mxu0 0
      %573 = vmatpush1.bf16.msra.mxu0 0
      %574 = vmatprep.subr.bf16.mxu0 0
      %575 = vmatpush1.bf16.msra.mxu0 0
      %576 = vmatprep.subr.bf16.mxu0 0
      %577 = vmatpush1.bf16.msra.mxu0 0
      %578 = vmatprep.subr.bf16.mxu0 0
      %579 = vmatpush1.bf16.msra.mxu0 0
      %580 = vmatprep.subr.bf16.mxu0 0
      %581 = vmatpush1.bf16.msra.mxu0 0
      %582 = vmatprep.subr.bf16.mxu0 0
      %583 = vmatpush1.bf16.msra.mxu0 0
      %584 = vmatprep.mubr.bf16.mxu0 0
      %585 = vmatmul.mubr.bf16.gmra.mrb[0].mxu0 %v550
      %v586 = vpop.f32.mrb[0].mxu0
      %v587 = vadd.f32 %v548, %v586
      %v588 = vpop.f32.mrb[0].mxu0
      %v589 = vpop.f32.mrb[0].mxu0
      %v590 = vpop.f32.mrb[0].mxu0
      %591 = vdwg.mxu0
      %v592 = vpow.pop %v587
      %v593 = vmul.f32 %v544, %v592
      %v594 = vsel %vm226, %v593, 0.0
      %595 = vadd.xlane.f32.xlu0 %v594
      %v596 = vpop.xlane.xlu0 %595
      %v597 = vrcp.pop %v596
      %v598 = vmul.f32 %v593, %v597
      %v599 = vpack.c.bf16 %v598, %v598
      %v600 = vmax.f32 %v598, 1e-12
      %v601 = vrcp.pop %v600
      %v602 = vmul.f32 %v266, %v601
      %v604 = vsel %vm29, %v599, 0
      %606 = vmatprep.subr.bf16.mxu0 0
      %607 = vmatpush1.bf16.msra.mxu0 %v267
      %608 = vmatprep.subr.bf16.mxu0 0
      %609 = vmatpush1.bf16.msra.mxu0 0
      %610 = vmatprep.subr.bf16.mxu0 0
      %611 = vmatpush1.bf16.msra.mxu0 0
      %612 = vmatprep.subr.bf16.mxu0 0
      %613 = vmatpush1.bf16.msra.mxu0 0
      %614 = vmatprep.subr.bf16.mxu0 0
      %615 = vmatpush1.bf16.msra.mxu0 0
      %616 = vmatprep.subr.bf16.mxu0 0
      %617 = vmatpush1.bf16.msra.mxu0 0
      %618 = vmatprep.subr.bf16.mxu0 0
      %619 = vmatpush1.bf16.msra.mxu0 0
      %620 = vmatprep.subr.bf16.mxu0 0
      %621 = vmatpush1.bf16.msra.mxu0 0
      %622 = vmatprep.subr.bf16.mxu0 0
      %623 = vmatpush1.bf16.msra.mxu0 0
      %624 = vmatprep.subr.bf16.mxu0 0
      %625 = vmatpush1.bf16.msra.mxu0 0
      %626 = vmatprep.subr.bf16.mxu0 0
      %627 = vmatpush1.bf16.msra.mxu0 0
      %628 = vmatprep.subr.bf16.mxu0 0
      %629 = vmatpush1.bf16.msra.mxu0 0
      %630 = vmatprep.subr.bf16.mxu0 0
      %631 = vmatpush1.bf16.msra.mxu0 0
      %632 = vmatprep.subr.bf16.mxu0 0
      %633 = vmatpush1.bf16.msra.mxu0 0
      %634 = vmatprep.subr.bf16.mxu0 0
      %635 = vmatpush1.bf16.msra.mxu0 0
      %636 = vmatprep.subr.bf16.mxu0 0
      %637 = vmatpush1.bf16.msra.mxu0 0
      %638 = vmatprep.mubr.bf16.mxu0 0
      %639 = vmatmul.mubr.bf16.gmra.mrb[0].mxu0 %v604
      %v640 = vpop.f32.mrb[0].mxu0
      %v641 = vadd.f32 %v602, %v640
      %v642 = vpop.f32.mrb[0].mxu0
      %v643 = vpop.f32.mrb[0].mxu0
      %v644 = vpop.f32.mrb[0].mxu0
      %645 = vdwg.mxu0
      %v646 = vpow.pop %v641
      %v647 = vmul.f32 %v598, %v646
      %v648 = vsel %vm226, %v647, 0.0
      %649 = vadd.xlane.f32.xlu0 %v648
      %v650 = vpop.xlane.xlu0 %649
      %v651 = vrcp.pop %v650
      %v652 = vmul.f32 %v647, %v651
      %v653 = vpack.c.bf16 %v652, %v652
      %v654 = vmax.f32 %v652, 1e-12
      %v655 = vrcp.pop %v654
      %v656 = vmul.f32 %v266, %v655
      %v658 = vsel %vm29, %v653, 0
      %660 = vmatprep.subr.bf16.mxu0 0
      %661 = vmatpush1.bf16.msra.mxu0 %v267
      %662 = vmatprep.subr.bf16.mxu0 0
      %663 = vmatpush1.bf16.msra.mxu0 0
      %664 = vmatprep.subr.bf16.mxu0 0
      %665 = vmatpush1.bf16.msra.mxu0 0
      %666 = vmatprep.subr.bf16.mxu0 0
      %667 = vmatpush1.bf16.msra.mxu0 0
      %668 = vmatprep.subr.bf16.mxu0 0
      %669 = vmatpush1.bf16.msra.mxu0 0
      %670 = vmatprep.subr.bf16.mxu0 0
      %671 = vmatpush1.bf16.msra.mxu0 0
      %672 = vmatprep.subr.bf16.mxu0 0
      %673 = vmatpush1.bf16.msra.mxu0 0
      %674 = vmatprep.subr.bf16.mxu0 0
      %675 = vmatpush1.bf16.msra.mxu0 0
      %676 = vmatprep.subr.bf16.mxu0 0
      %677 = vmatpush1.bf16.msra.mxu0 0
      %678 = vmatprep.subr.bf16.mxu0 0
      %679 = vmatpush1.bf16.msra.mxu0 0
      %680 = vmatprep.subr.bf16.mxu0 0
      %681 = vmatpush1.bf16.msra.mxu0 0
      %682 = vmatprep.subr.bf16.mxu0 0
      %683 = vmatpush1.bf16.msra.mxu0 0
      %684 = vmatprep.subr.bf16.mxu0 0
      %685 = vmatpush1.bf16.msra.mxu0 0
      %686 = vmatprep.subr.bf16.mxu0 0
      %687 = vmatpush1.bf16.msra.mxu0 0
      %688 = vmatprep.subr.bf16.mxu0 0
      %689 = vmatpush1.bf16.msra.mxu0 0
      %690 = vmatprep.subr.bf16.mxu0 0
      %691 = vmatpush1.bf16.msra.mxu0 0
      %692 = vmatprep.mubr.bf16.mxu0 0
      %693 = vmatmul.mubr.bf16.gmra.mrb[0].mxu0 %v658
      %v694 = vpop.f32.mrb[0].mxu0
      %v695 = vadd.f32 %v656, %v694
      %v696 = vpop.f32.mrb[0].mxu0
      %v697 = vpop.f32.mrb[0].mxu0
      %v698 = vpop.f32.mrb[0].mxu0
      %699 = vdwg.mxu0
      %v700 = vpow.pop %v695
      %v701 = vmul.f32 %v652, %v700
      %v702 = vsel %vm226, %v701, 0.0
      %703 = vadd.xlane.f32.xlu0 %v702
      %v704 = vpop.xlane.xlu0 %703
      %v705 = vrcp.pop %v704
      %v706 = vmul.f32 %v701, %v705
      %v707 = vpack.c.bf16 %v706, %v706
      %v708 = vmax.f32 %v706, 1e-12
      %v709 = vrcp.pop %v708
      %v710 = vmul.f32 %v266, %v709
      %v712 = vsel %vm29, %v707, 0
      %714 = vmatprep.subr.bf16.mxu0 0
      %715 = vmatpush1.bf16.msra.mxu0 %v267
      %716 = vmatprep.subr.bf16.mxu0 0
      %717 = vmatpush1.bf16.msra.mxu0 0
      %718 = vmatprep.subr.bf16.mxu0 0
      %719 = vmatpush1.bf16.msra.mxu0 0
      %720 = vmatprep.subr.bf16.mxu0 0
      %721 = vmatpush1.bf16.msra.mxu0 0
      %722 = vmatprep.subr.bf16.mxu0 0
      %723 = vmatpush1.bf16.msra.mxu0 0
      %724 = vmatprep.subr.bf16.mxu0 0
      %725 = vmatpush1.bf16.msra.mxu0 0
      %726 = vmatprep.subr.bf16.mxu0 0
      %727 = vmatpush1.bf16.msra.mxu0 0
      %728 = vmatprep.subr.bf16.mxu0 0
      %729 = vmatpush1.bf16.msra.mxu0 0
      %730 = vmatprep.subr.bf16.mxu0 0
      %731 = vmatpush1.bf16.msra.mxu0 0
      %732 = vmatprep.subr.bf16.mxu0 0
      %733 = vmatpush1.bf16.msra.mxu0 0
      %734 = vmatprep.subr.bf16.mxu0 0
      %735 = vmatpush1.bf16.msra.mxu0 0
      %736 = vmatprep.subr.bf16.mxu0 0
      %737 = vmatpush1.bf16.msra.mxu0 0
      %738 = vmatprep.subr.bf16.mxu0 0
      %739 = vmatpush1.bf16.msra.mxu0 0
      %740 = vmatprep.subr.bf16.mxu0 0
      %741 = vmatpush1.bf16.msra.mxu0 0
      %742 = vmatprep.subr.bf16.mxu0 0
      %743 = vmatpush1.bf16.msra.mxu0 0
      %744 = vmatprep.subr.bf16.mxu0 0
      %745 = vmatpush1.bf16.msra.mxu0 0
      %746 = vmatprep.mubr.bf16.mxu0 0
      %747 = vmatmul.mubr.bf16.gmra.mrb[0].mxu0 %v712
      %v748 = vpop.f32.mrb[0].mxu0
      %v749 = vadd.f32 %v710, %v748
      %v750 = vpop.f32.mrb[0].mxu0
      %v751 = vpop.f32.mrb[0].mxu0
      %v752 = vpop.f32.mrb[0].mxu0
      %753 = vdwg.mxu0
      %v754 = vpow.pop %v749
      %v755 = vmul.f32 %v706, %v754
      %v756 = vsel %vm226, %v755, 0.0
      %757 = vadd.xlane.f32.xlu0 %v756
      %v758 = vpop.xlane.xlu0 %757
      %v759 = vrcp.pop %v758
      %v760 = vmul.f32 %v755, %v759
      %v761 = vpack.c.bf16 %v760, %v760
      %v762 = vmax.f32 %v760, 1e-12
      %v763 = vrcp.pop %v762
      %v764 = vmul.f32 %v266, %v763
      %v766 = vsel %vm29, %v761, 0
      %768 = vmatprep.subr.bf16.mxu0 0
      %769 = vmatpush1.bf16.msra.mxu0 %v267
      %770 = vmatprep.subr.bf16.mxu0 0
      %771 = vmatpush1.bf16.msra.mxu0 0
      %772 = vmatprep.subr.bf16.mxu0 0
      %773 = vmatpush1.bf16.msra.mxu0 0
      %774 = vmatprep.subr.bf16.mxu0 0
      %775 = vmatpush1.bf16.msra.mxu0 0
      %776 = vmatprep.subr.bf16.mxu0 0
      %777 = vmatpush1.bf16.msra.mxu0 0
      %778 = vmatprep.subr.bf16.mxu0 0
      %779 = vmatpush1.bf16.msra.mxu0 0
      %780 = vmatprep.subr.bf16.mxu0 0
      %781 = vmatpush1.bf16.msra.mxu0 0
      %782 = vmatprep.subr.bf16.mxu0 0
      %783 = vmatpush1.bf16.msra.mxu0 0
      %784 = vmatprep.subr.bf16.mxu0 0
      %785 = vmatpush1.bf16.msra.mxu0 0
      %786 = vmatprep.subr.bf16.mxu0 0
      %787 = vmatpush1.bf16.msra.mxu0 0
      %788 = vmatprep.subr.bf16.mxu0 0
      %789 = vmatpush1.bf16.msra.mxu0 0
      %790 = vmatprep.subr.bf16.mxu0 0
      %791 = vmatpush1.bf16.msra.mxu0 0
      %792 = vmatprep.subr.bf16.mxu0 0
      %793 = vmatpush1.bf16.msra.mxu0 0
      %794 = vmatprep.subr.bf16.mxu0 0
      %795 = vmatpush1.bf16.msra.mxu0 0
      %796 = vmatprep.subr.bf16.mxu0 0
      %797 = vmatpush1.bf16.msra.mxu0 0
      %798 = vmatprep.subr.bf16.mxu0 0
      %799 = vmatpush1.bf16.msra.mxu0 0
      %800 = vmatprep.mubr.bf16.mxu0 0
      %801 = vmatmul.mubr.bf16.gmra.mrb[0].mxu0 %v766
      %v802 = vpop.f32.mrb[0].mxu0
      %v803 = vadd.f32 %v764, %v802
      %v804 = vpop.f32.mrb[0].mxu0
      %v805 = vpop.f32.mrb[0].mxu0
      %v806 = vpop.f32.mrb[0].mxu0
      %807 = vdwg.mxu0
      %v808 = vpow.pop %v803
      %v809 = vmul.f32 %v760, %v808
      %v810 = vsel %vm226, %v809, 0.0
      %811 = vadd.xlane.f32.xlu0 %v810
      %v812 = vpop.xlane.xlu0 %811
      %v813 = vrcp.pop %v812
      %v814 = vmul.f32 %v809, %v813
      %v815 = vpack.c.bf16 %v814, %v814
      %v816 = vmax.f32 %v814, 1e-12
      %v817 = vrcp.pop %v816
      %v818 = vmul.f32 %v266, %v817
      %v820 = vsel %vm29, %v815, 0
      %822 = vmatprep.subr.bf16.mxu0 0
      %823 = vmatpush1.bf16.msra.mxu0 %v267
      %824 = vmatprep.subr.bf16.mxu0 0
      %825 = vmatpush1.bf16.msra.mxu0 0
      %826 = vmatprep.subr.bf16.mxu0 0
      %827 = vmatpush1.bf16.msra.mxu0 0
      %828 = vmatprep.subr.bf16.mxu0 0
      %829 = vmatpush1.bf16.msra.mxu0 0
      %830 = vmatprep.subr.bf16.mxu0 0
      %831 = vmatpush1.bf16.msra.mxu0 0
      %832 = vmatprep.subr.bf16.mxu0 0
      %833 = vmatpush1.bf16.msra.mxu0 0
      %834 = vmatprep.subr.bf16.mxu0 0
      %835 = vmatpush1.bf16.msra.mxu0 0
      %836 = vmatprep.subr.bf16.mxu0 0
      %837 = vmatpush1.bf16.msra.mxu0 0
      %838 = vmatprep.subr.bf16.mxu0 0
      %839 = vmatpush1.bf16.msra.mxu0 0
      %840 = vmatprep.subr.bf16.mxu0 0
      %841 = vmatpush1.bf16.msra.mxu0 0
      %842 = vmatprep.subr.bf16.mxu0 0
      %843 = vmatpush1.bf16.msra.mxu0 0
      %844 = vmatprep.subr.bf16.mxu0 0
      %845 = vmatpush1.bf16.msra.mxu0 0
      %846 = vmatprep.subr.bf16.mxu0 0
      %847 = vmatpush1.bf16.msra.mxu0 0
      %848 = vmatprep.subr.bf16.mxu0 0
      %849 = vmatpush1.bf16.msra.mxu0 0
      %850 = vmatprep.subr.bf16.mxu0 0
      %851 = vmatpush1.bf16.msra.mxu0 0
      %852 = vmatprep.subr.bf16.mxu0 0
      %853 = vmatpush1.bf16.msra.mxu0 0
      %854 = vmatprep.mubr.bf16.mxu0 0
      %855 = vmatmul.mubr.bf16.gmra.mrb[0].mxu0 %v820
      %v856 = vpop.f32.mrb[0].mxu0
      %v857 = vadd.f32 %v818, %v856
      %v858 = vpop.f32.mrb[0].mxu0
      %v859 = vpop.f32.mrb[0].mxu0
      %v860 = vpop.f32.mrb[0].mxu0
      %861 = vdwg.mxu0
      %v862 = vpow.pop %v857
      %v863 = vmul.f32 %v814, %v862
      %v864 = vsel %vm226, %v863, 0.0
      %865 = vadd.xlane.f32.xlu0 %v864
      %v866 = vpop.xlane.xlu0 %865
      %v867 = vrcp.pop %v866
      %v868 = vmul.f32 %v863, %v867
      %v869 = vpack.c.bf16 %v868, %v868
      %v870 = vmax.f32 %v868, 1e-12
      %v871 = vrcp.pop %v870
      %v872 = vmul.f32 %v266, %v871
      %v874 = vsel %vm29, %v869, 0
      %876 = vmatprep.subr.bf16.mxu0 0
      %877 = vmatpush1.bf16.msra.mxu0 %v267
      %878 = vmatprep.subr.bf16.mxu0 0
      %879 = vmatpush1.bf16.msra.mxu0 0
      %880 = vmatprep.subr.bf16.mxu0 0
      %881 = vmatpush1.bf16.msra.mxu0 0
      %882 = vmatprep.subr.bf16.mxu0 0
      %883 = vmatpush1.bf16.msra.mxu0 0
      %884 = vmatprep.subr.bf16.mxu0 0
      %885 = vmatpush1.bf16.msra.mxu0 0
      %886 = vmatprep.subr.bf16.mxu0 0
      %887 = vmatpush1.bf16.msra.mxu0 0
      %888 = vmatprep.subr.bf16.mxu0 0
      %889 = vmatpush1.bf16.msra.mxu0 0
      %890 = vmatprep.subr.bf16.mxu0 0
      %891 = vmatpush1.bf16.msra.mxu0 0
      %892 = vmatprep.subr.bf16.mxu0 0
      %893 = vmatpush1.bf16.msra.mxu0 0
      %894 = vmatprep.subr.bf16.mxu0 0
      %895 = vmatpush1.bf16.msra.mxu0 0
      %896 = vmatprep.subr.bf16.mxu0 0
      %897 = vmatpush1.bf16.msra.mxu0 0
      %898 = vmatprep.subr.bf16.mxu0 0
      %899 = vmatpush1.bf16.msra.mxu0 0
      %900 = vmatprep.subr.bf16.mxu0 0
      %901 = vmatpush1.bf16.msra.mxu0 0
      %902 = vmatprep.subr.bf16.mxu0 0
      %903 = vmatpush1.bf16.msra.mxu0 0
      %904 = vmatprep.subr.bf16.mxu0 0
      %905 = vmatpush1.bf16.msra.mxu0 0
      %906 = vmatprep.subr.bf16.mxu0 0
      %907 = vmatpush1.bf16.msra.mxu0 0
      %908 = vmatprep.mubr.bf16.mxu0 0
      %909 = vmatmul.mubr.bf16.gmra.mrb[0].mxu0 %v874
      %v910 = vpop.f32.mrb[0].mxu0
      %v911 = vadd.f32 %v872, %v910
      %v912 = vpop.f32.mrb[0].mxu0
      %v913 = vpop.f32.mrb[0].mxu0
      %v914 = vpop.f32.mrb[0].mxu0
      %915 = vdwg.mxu0
      %v916 = vpow.pop %v911
      %v917 = vmul.f32 %v868, %v916
      %v918 = vsel %vm226, %v917, 0.0
      %919 = vadd.xlane.f32.xlu0 %v918
      %v920 = vpop.xlane.xlu0 %919
      %v921 = vrcp.pop %v920
      %v922 = vmul.f32 %v917, %v921
      %v923 = vpack.c.bf16 %v922, %v922
      %v924 = vmax.f32 %v922, 1e-12
      %v925 = vrcp.pop %v924
      %v926 = vmul.f32 %v266, %v925
      %v928 = vsel %vm29, %v923, 0
      %930 = vmatprep.subr.bf16.mxu0 0
      %931 = vmatpush1.bf16.msra.mxu0 %v267
      %932 = vmatprep.subr.bf16.mxu0 0
      %933 = vmatpush1.bf16.msra.mxu0 0
      %934 = vmatprep.subr.bf16.mxu0 0
      %935 = vmatpush1.bf16.msra.mxu0 0
      %936 = vmatprep.subr.bf16.mxu0 0
      %937 = vmatpush1.bf16.msra.mxu0 0
      %938 = vmatprep.subr.bf16.mxu0 0
      %939 = vmatpush1.bf16.msra.mxu0 0
      %940 = vmatprep.subr.bf16.mxu0 0
      %941 = vmatpush1.bf16.msra.mxu0 0
      %942 = vmatprep.subr.bf16.mxu0 0
      %943 = vmatpush1.bf16.msra.mxu0 0
      %944 = vmatprep.subr.bf16.mxu0 0
      %945 = vmatpush1.bf16.msra.mxu0 0
      %946 = vmatprep.subr.bf16.mxu0 0
      %947 = vmatpush1.bf16.msra.mxu0 0
      %948 = vmatprep.subr.bf16.mxu0 0
      %949 = vmatpush1.bf16.msra.mxu0 0
      %950 = vmatprep.subr.bf16.mxu0 0
      %951 = vmatpush1.bf16.msra.mxu0 0
      %952 = vmatprep.subr.bf16.mxu0 0
      %953 = vmatpush1.bf16.msra.mxu0 0
      %954 = vmatprep.subr.bf16.mxu0 0
      %955 = vmatpush1.bf16.msra.mxu0 0
      %956 = vmatprep.subr.bf16.mxu0 0
      %957 = vmatpush1.bf16.msra.mxu0 0
      %958 = vmatprep.subr.bf16.mxu0 0
      %959 = vmatpush1.bf16.msra.mxu0 0
      %960 = vmatprep.subr.bf16.mxu0 0
      %961 = vmatpush1.bf16.msra.mxu0 0
      %962 = vmatprep.mubr.bf16.mxu0 0
      %963 = vmatmul.mubr.bf16.gmra.mrb[0].mxu0 %v928
      %v964 = vpop.f32.mrb[0].mxu0
      %v965 = vadd.f32 %v926, %v964
      %v966 = vpop.f32.mrb[0].mxu0
      %v967 = vpop.f32.mrb[0].mxu0
      %v968 = vpop.f32.mrb[0].mxu0
      %969 = vdwg.mxu0
      %v970 = vpow.pop %v965
      %v971 = vmul.f32 %v922, %v970
      %v972 = vsel %vm226, %v971, 0.0
      %973 = vadd.xlane.f32.xlu0 %v972
      %v974 = vpop.xlane.xlu0 %973
      %v975 = vrcp.pop %v974
      %v976 = vmul.f32 %v971, %v975
      %v977 = vpack.c.bf16 %v976, %v976
      %v978 = vmax.f32 %v976, 1e-12
      %v979 = vrcp.pop %v978
      %v980 = vmul.f32 %v266, %v979
      %v982 = vsel %vm29, %v977, 0
      %984 = vmatprep.subr.bf16.mxu0 0
      %985 = vmatpush1.bf16.msra.mxu0 %v267
      %986 = vmatprep.subr.bf16.mxu0 0
      %987 = vmatpush1.bf16.msra.mxu0 0
      %988 = vmatprep.subr.bf16.mxu0 0
      %989 = vmatpush1.bf16.msra.mxu0 0
      %990 = vmatprep.subr.bf16.mxu0 0
      %991 = vmatpush1.bf16.msra.mxu0 0
      %992 = vmatprep.subr.bf16.mxu0 0
      %993 = vmatpush1.bf16.msra.mxu0 0
      %994 = vmatprep.subr.bf16.mxu0 0
      %995 = vmatpush1.bf16.msra.mxu0 0
      %996 = vmatprep.subr.bf16.mxu0 0
      %997 = vmatpush1.bf16.msra.mxu0 0
      %998 = vmatprep.subr.bf16.mxu0 0
      %999 = vmatpush1.bf16.msra.mxu0 0
      %1000 = vmatprep.subr.bf16.mxu0 0
      %1001 = vmatpush1.bf16.msra.mxu0 0
      %1002 = vmatprep.subr.bf16.mxu0 0
      %1003 = vmatpush1.bf16.msra.mxu0 0
      %1004 = vmatprep.subr.bf16.mxu0 0
      %1005 = vmatpush1.bf16.msra.mxu0 0
      %1006 = vmatprep.subr.bf16.mxu0 0
      %1007 = vmatpush1.bf16.msra.mxu0 0
      %1008 = vmatprep.subr.bf16.mxu0 0
      %1009 = vmatpush1.bf16.msra.mxu0 0
      %1010 = vmatprep.subr.bf16.mxu0 0
      %1011 = vmatpush1.bf16.msra.mxu0 0
      %1012 = vmatprep.subr.bf16.mxu0 0
      %1013 = vmatpush1.bf16.msra.mxu0 0
      %1014 = vmatprep.subr.bf16.mxu0 0
      %1015 = vmatpush1.bf16.msra.mxu0 0
      %1016 = vmatprep.mubr.bf16.mxu0 0
      %1017 = vmatmul.mubr.bf16.gmra.mrb[0].mxu0 %v982
      %v1018 = vpop.f32.mrb[0].mxu0
      %v1019 = vadd.f32 %v980, %v1018
      %v1020 = vpop.f32.mrb[0].mxu0
      %v1021 = vpop.f32.mrb[0].mxu0
      %v1022 = vpop.f32.mrb[0].mxu0
      %1023 = vdwg.mxu0
      %v1024 = vpow.pop %v1019
      %v1025 = vmul.f32 %v976, %v1024
      %v1026 = vsel %vm226, %v1025, 0.0
      %1027 = vadd.xlane.f32.xlu0 %v1026
      %v1028 = vpop.xlane.xlu0 %1027
      %v1029 = vrcp.pop %v1028
      %v1030 = vmul.f32 %v1025, %v1029
      %v1031 = vpack.c.bf16 %v1030, %v1030
      %v1032 = vmax.f32 %v1030, 1e-12
      %v1033 = vrcp.pop %v1032
      %v1034 = vmul.f32 %v266, %v1033
      %v1036 = vsel %vm29, %v1031, 0
      %1038 = vmatprep.subr.bf16.mxu0 0
      %1039 = vmatpush1.bf16.msra.mxu0 %v267
      %1040 = vmatprep.subr.bf16.mxu0 0
      %1041 = vmatpush1.bf16.msra.mxu0 0
      %1042 = vmatprep.subr.bf16.mxu0 0
      %1043 = vmatpush1.bf16.msra.mxu0 0
      %1044 = vmatprep.subr.bf16.mxu0 0
      %1045 = vmatpush1.bf16.msra.mxu0 0
      %1046 = vmatprep.subr.bf16.mxu0 0
      %1047 = vmatpush1.bf16.msra.mxu0 0
      %1048 = vmatprep.subr.bf16.mxu0 0
      %1049 = vmatpush1.bf16.msra.mxu0 0
      %1050 = vmatprep.subr.bf16.mxu0 0
      %1051 = vmatpush1.bf16.msra.mxu0 0
      %1052 = vmatprep.subr.bf16.mxu0 0
      %1053 = vmatpush1.bf16.msra.mxu0 0
      %1054 = vmatprep.subr.bf16.mxu0 0
      %1055 = vmatpush1.bf16.msra.mxu0 0
      %1056 = vmatprep.subr.bf16.mxu0 0
      %1057 = vmatpush1.bf16.msra.mxu0 0
      %1058 = vmatprep.subr.bf16.mxu0 0
      %1059 = vmatpush1.bf16.msra.mxu0 0
      %1060 = vmatprep.subr.bf16.mxu0 0
      %1061 = vmatpush1.bf16.msra.mxu0 0
      %1062 = vmatprep.subr.bf16.mxu0 0
      %1063 = vmatpush1.bf16.msra.mxu0 0
      %1064 = vmatprep.subr.bf16.mxu0 0
      %1065 = vmatpush1.bf16.msra.mxu0 0
      %1066 = vmatprep.subr.bf16.mxu0 0
      %1067 = vmatpush1.bf16.msra.mxu0 0
      %1068 = vmatprep.subr.bf16.mxu0 0
      %1069 = vmatpush1.bf16.msra.mxu0 0
      %1070 = vmatprep.mubr.bf16.mxu0 0
      %1071 = vmatmul.mubr.bf16.gmra.mrb[0].mxu0 %v1036
      %v1072 = vpop.f32.mrb[0].mxu0
      %v1073 = vadd.f32 %v1034, %v1072
      %v1074 = vpop.f32.mrb[0].mxu0
      %v1075 = vpop.f32.mrb[0].mxu0
      %v1076 = vpop.f32.mrb[0].mxu0
      %1077 = vdwg.mxu0
      %v1078 = vpow.pop %v1073
      %v1079 = vmul.f32 %v1030, %v1078
      %v1080 = vsel %vm226, %v1079, 0.0
      %1081 = vadd.xlane.f32.xlu0 %v1080
      %v1082 = vpop.xlane.xlu0 %1081
      %v1083 = vrcp.pop %v1082
      %v1084 = vmul.f32 %v1079, %v1083
      %v1085 = vpack.c.bf16 %v1084, %v1084
      %v1086 = vmax.f32 %v1084, 1e-12
      %v1087 = vrcp.pop %v1086
      %v1088 = vmul.f32 %v266, %v1087
      %v1090 = vsel %vm29, %v1085, 0
      %1092 = vmatprep.subr.bf16.mxu0 0
      %1093 = vmatpush1.bf16.msra.mxu0 %v267
      %1094 = vmatprep.subr.bf16.mxu0 0
      %1095 = vmatpush1.bf16.msra.mxu0 0
      %1096 = vmatprep.subr.bf16.mxu0 0
      %1097 = vmatpush1.bf16.msra.mxu0 0
      %1098 = vmatprep.subr.bf16.mxu0 0
      %1099 = vmatpush1.bf16.msra.mxu0 0
      %1100 = vmatprep.subr.bf16.mxu0 0
      %1101 = vmatpush1.bf16.msra.mxu0 0
      %1102 = vmatprep.subr.bf16.mxu0 0
      %1103 = vmatpush1.bf16.msra.mxu0 0
      %1104 = vmatprep.subr.bf16.mxu0 0
      %1105 = vmatpush1.bf16.msra.mxu0 0
      %1106 = vmatprep.subr.bf16.mxu0 0
      %1107 = vmatpush1.bf16.msra.mxu0 0
      %1108 = vmatprep.subr.bf16.mxu0 0
      %1109 = vmatpush1.bf16.msra.mxu0 0
      %1110 = vmatprep.subr.bf16.mxu0 0
      %1111 = vmatpush1.bf16.msra.mxu0 0
      %1112 = vmatprep.subr.bf16.mxu0 0
      %1113 = vmatpush1.bf16.msra.mxu0 0
      %1114 = vmatprep.subr.bf16.mxu0 0
      %1115 = vmatpush1.bf16.msra.mxu0 0
      %1116 = vmatprep.subr.bf16.mxu0 0
      %1117 = vmatpush1.bf16.msra.mxu0 0
      %1118 = vmatprep.subr.bf16.mxu0 0
      %1119 = vmatpush1.bf16.msra.mxu0 0
      %1120 = vmatprep.subr.bf16.mxu0 0
      %1121 = vmatpush1.bf16.msra.mxu0 0
      %1122 = vmatprep.subr.bf16.mxu0 0
      %1123 = vmatpush1.bf16.msra.mxu0 0
      %1124 = vmatprep.mubr.bf16.mxu0 0
      %1125 = vmatmul.mubr.bf16.gmra.mrb[0].mxu0 %v1090
      %v1126 = vpop.f32.mrb[0].mxu0
      %v1127 = vadd.f32 %v1088, %v1126
      %v1128 = vpop.f32.mrb[0].mxu0
      %v1129 = vpop.f32.mrb[0].mxu0
      %v1130 = vpop.f32.mrb[0].mxu0
      %1131 = vdwg.mxu0
      %v1132 = vpow.pop %v1127
      %v1133 = vmul.f32 %v1084, %v1132
      %v1134 = vsel %vm226, %v1133, 0.0
      %1135 = vadd.xlane.f32.xlu0 %v1134
      %v1136 = vpop.xlane.xlu0 %1135
      %v1137 = vrcp.pop %v1136
      %v1138 = vmul.f32 %v1133, %v1137
      %v1139 = vpack.c.bf16 %v1138, %v1138
      %v1140 = vmax.f32 %v1138, 1e-12
      %v1141 = vrcp.pop %v1140
      %v1142 = vmul.f32 %v266, %v1141
      %v1144 = vsel %vm29, %v1139, 0
      %1146 = vmatprep.subr.bf16.mxu0 0
      %1147 = vmatpush1.bf16.msra.mxu0 %v267
      %1148 = vmatprep.subr.bf16.mxu0 0
      %1149 = vmatpush1.bf16.msra.mxu0 0
      %1150 = vmatprep.subr.bf16.mxu0 0
      %1151 = vmatpush1.bf16.msra.mxu0 0
      %1152 = vmatprep.subr.bf16.mxu0 0
      %1153 = vmatpush1.bf16.msra.mxu0 0
      %1154 = vmatprep.subr.bf16.mxu0 0
      %1155 = vmatpush1.bf16.msra.mxu0 0
      %1156 = vmatprep.subr.bf16.mxu0 0
      %1157 = vmatpush1.bf16.msra.mxu0 0
      %1158 = vmatprep.subr.bf16.mxu0 0
      %1159 = vmatpush1.bf16.msra.mxu0 0
      %1160 = vmatprep.subr.bf16.mxu0 0
      %1161 = vmatpush1.bf16.msra.mxu0 0
      %1162 = vmatprep.subr.bf16.mxu0 0
      %1163 = vmatpush1.bf16.msra.mxu0 0
      %1164 = vmatprep.subr.bf16.mxu0 0
      %1165 = vmatpush1.bf16.msra.mxu0 0
      %1166 = vmatprep.subr.bf16.mxu0 0
      %1167 = vmatpush1.bf16.msra.mxu0 0
      %1168 = vmatprep.subr.bf16.mxu0 0
      %1169 = vmatpush1.bf16.msra.mxu0 0
      %1170 = vmatprep.subr.bf16.mxu0 0
      %1171 = vmatpush1.bf16.msra.mxu0 0
      %1172 = vmatprep.subr.bf16.mxu0 0
      %1173 = vmatpush1.bf16.msra.mxu0 0
      %1174 = vmatprep.subr.bf16.mxu0 0
      %1175 = vmatpush1.bf16.msra.mxu0 0
      %1176 = vmatprep.subr.bf16.mxu0 0
      %1177 = vmatpush1.bf16.msra.mxu0 0
      %1178 = vmatprep.mubr.bf16.mxu0 0
      %1179 = vmatmul.mubr.bf16.gmra.mrb[0].mxu0 %v1144
      %v1180 = vpop.f32.mrb[0].mxu0
      %v1181 = vadd.f32 %v1142, %v1180
      %v1182 = vpop.f32.mrb[0].mxu0
      %v1183 = vpop.f32.mrb[0].mxu0
      %v1184 = vpop.f32.mrb[0].mxu0
      %1185 = vdwg.mxu0
      %v1186 = vpow.pop %v1181
      %v1187 = vmul.f32 %v1138, %v1186
      %v1188 = vsel %vm226, %v1187, 0.0
      %1189 = vadd.xlane.f32.xlu0 %v1188
      %v1190 = vpop.xlane.xlu0 %1189
      %v1191 = vrcp.pop %v1190
      %v1192 = vmul.f32 %v1187, %v1191
      %v1193 = vpack.c.bf16 %v1192, %v1192
      %v1194 = vmax.f32 %v1192, 1e-12
      %v1195 = vrcp.pop %v1194
      %v1196 = vmul.f32 %v266, %v1195
      %v1198 = vsel %vm29, %v1193, 0
      %1200 = vmatprep.subr.bf16.mxu0 0
      %1201 = vmatpush1.bf16.msra.mxu0 %v267
      %1202 = vmatprep.subr.bf16.mxu0 0
      %1203 = vmatpush1.bf16.msra.mxu0 0
      %1204 = vmatprep.subr.bf16.mxu0 0
      %1205 = vmatpush1.bf16.msra.mxu0 0
      %1206 = vmatprep.subr.bf16.mxu0 0
      %1207 = vmatpush1.bf16.msra.mxu0 0
      %1208 = vmatprep.subr.bf16.mxu0 0
      %1209 = vmatpush1.bf16.msra.mxu0 0
      %1210 = vmatprep.subr.bf16.mxu0 0
      %1211 = vmatpush1.bf16.msra.mxu0 0
      %1212 = vmatprep.subr.bf16.mxu0 0
      %1213 = vmatpush1.bf16.msra.mxu0 0
      %1214 = vmatprep.subr.bf16.mxu0 0
      %1215 = vmatpush1.bf16.msra.mxu0 0
      %1216 = vmatprep.subr.bf16.mxu0 0
      %1217 = vmatpush1.bf16.msra.mxu0 0
      %1218 = vmatprep.subr.bf16.mxu0 0
      %1219 = vmatpush1.bf16.msra.mxu0 0
      %1220 = vmatprep.subr.bf16.mxu0 0
      %1221 = vmatpush1.bf16.msra.mxu0 0
      %1222 = vmatprep.subr.bf16.mxu0 0
      %1223 = vmatpush1.bf16.msra.mxu0 0
      %1224 = vmatprep.subr.bf16.mxu0 0
      %1225 = vmatpush1.bf16.msra.mxu0 0
      %1226 = vmatprep.subr.bf16.mxu0 0
      %1227 = vmatpush1.bf16.msra.mxu0 0
      %1228 = vmatprep.subr.bf16.mxu0 0
      %1229 = vmatpush1.bf16.msra.mxu0 0
      %1230 = vmatprep.subr.bf16.mxu0 0
      %1231 = vmatpush1.bf16.msra.mxu0 0
      %1232 = vmatprep.mubr.bf16.mxu0 0
      %1233 = vmatmul.mubr.bf16.gmra.mrb[0].mxu0 %v1198
      %v1234 = vpop.f32.mrb[0].mxu0
      %v1235 = vadd.f32 %v1196, %v1234
      %v1236 = vpop.f32.mrb[0].mxu0
      %v1237 = vpop.f32.mrb[0].mxu0
      %v1238 = vpop.f32.mrb[0].mxu0
      %1239 = vdwg.mxu0
      %v1240 = vpow.pop %v1235
      %v1241 = vmul.f32 %v1192, %v1240
      %v1242 = vsel %vm226, %v1241, 0.0
      %1243 = vadd.xlane.f32.xlu0 %v1242
      %v1244 = vpop.xlane.xlu0 %1243
      %v1245 = vrcp.pop %v1244
      %v1246 = vmul.f32 %v1241, %v1245
      %v1247 = vpack.c.bf16 %v1246, %v1246
      %v1248 = vmax.f32 %v1246, 1e-12
      %v1249 = vrcp.pop %v1248
      %v1250 = vmul.f32 %v266, %v1249
      %v1252 = vsel %vm29, %v1247, 0
      %1254 = vmatprep.subr.bf16.mxu0 0
      %1255 = vmatpush1.bf16.msra.mxu0 %v267
      %1256 = vmatprep.subr.bf16.mxu0 0
      %1257 = vmatpush1.bf16.msra.mxu0 0
      %1258 = vmatprep.subr.bf16.mxu0 0
      %1259 = vmatpush1.bf16.msra.mxu0 0
      %1260 = vmatprep.subr.bf16.mxu0 0
      %1261 = vmatpush1.bf16.msra.mxu0 0
      %1262 = vmatprep.subr.bf16.mxu0 0
      %1263 = vmatpush1.bf16.msra.mxu0 0
      %1264 = vmatprep.subr.bf16.mxu0 0
      %1265 = vmatpush1.bf16.msra.mxu0 0
      %1266 = vmatprep.subr.bf16.mxu0 0
      %1267 = vmatpush1.bf16.msra.mxu0 0
      %1268 = vmatprep.subr.bf16.mxu0 0
      %1269 = vmatpush1.bf16.msra.mxu0 0
      %1270 = vmatprep.subr.bf16.mxu0 0
      %1271 = vmatpush1.bf16.msra.mxu0 0
      %1272 = vmatprep.subr.bf16.mxu0 0
      %1273 = vmatpush1.bf16.msra.mxu0 0
      %1274 = vmatprep.subr.bf16.mxu0 0
      %1275 = vmatpush1.bf16.msra.mxu0 0
      %1276 = vmatprep.subr.bf16.mxu0 0
      %1277 = vmatpush1.bf16.msra.mxu0 0
      %1278 = vmatprep.subr.bf16.mxu0 0
      %1279 = vmatpush1.bf16.msra.mxu0 0
      %1280 = vmatprep.subr.bf16.mxu0 0
      %1281 = vmatpush1.bf16.msra.mxu0 0
      %1282 = vmatprep.subr.bf16.mxu0 0
      %1283 = vmatpush1.bf16.msra.mxu0 0
      %1284 = vmatprep.subr.bf16.mxu0 0
      %1285 = vmatpush1.bf16.msra.mxu0 0
      %1286 = vmatprep.mubr.bf16.mxu0 0
      %1287 = vmatmul.mubr.bf16.gmra.mrb[0].mxu0 %v1252
      %v1288 = vpop.f32.mrb[0].mxu0
      %v1289 = vadd.f32 %v1250, %v1288
      %v1290 = vpop.f32.mrb[0].mxu0
      %v1291 = vpop.f32.mrb[0].mxu0
      %v1292 = vpop.f32.mrb[0].mxu0
      %1293 = vdwg.mxu0
      %v1294 = vpow.pop %v1289
      %v1295 = vmul.f32 %v1246, %v1294
      %v1296 = vsel %vm226, %v1295, 0.0
      %1297 = vadd.xlane.f32.xlu0 %v1296
      %v1298 = vpop.xlane.xlu0 %1297
      %v1299 = vrcp.pop %v1298
      %v1300 = vmul.f32 %v1295, %v1299
      %v1301 = vpack.c.bf16 %v1300, %v1300
      %v1302 = vmax.f32 %v1300, 1e-12
      %v1303 = vrcp.pop %v1302
      %v1304 = vmul.f32 %v266, %v1303
      %v1306 = vsel %vm29, %v1301, 0
      %1308 = vmatprep.subr.bf16.mxu0 0
      %1309 = vmatpush1.bf16.msra.mxu0 %v267
      %1310 = vmatprep.subr.bf16.mxu0 0
      %1311 = vmatpush1.bf16.msra.mxu0 0
      %1312 = vmatprep.subr.bf16.mxu0 0
      %1313 = vmatpush1.bf16.msra.mxu0 0
      %1314 = vmatprep.subr.bf16.mxu0 0
      %1315 = vmatpush1.bf16.msra.mxu0 0
      %1316 = vmatprep.subr.bf16.mxu0 0
      %1317 = vmatpush1.bf16.msra.mxu0 0
      %1318 = vmatprep.subr.bf16.mxu0 0
      %1319 = vmatpush1.bf16.msra.mxu0 0
      %1320 = vmatprep.subr.bf16.mxu0 0
      %1321 = vmatpush1.bf16.msra.mxu0 0
      %1322 = vmatprep.subr.bf16.mxu0 0
      %1323 = vmatpush1.bf16.msra.mxu0 0
      %1324 = vmatprep.subr.bf16.mxu0 0
      %1325 = vmatpush1.bf16.msra.mxu0 0
      %1326 = vmatprep.subr.bf16.mxu0 0
      %1327 = vmatpush1.bf16.msra.mxu0 0
      %1328 = vmatprep.subr.bf16.mxu0 0
      %1329 = vmatpush1.bf16.msra.mxu0 0
      %1330 = vmatprep.subr.bf16.mxu0 0
      %1331 = vmatpush1.bf16.msra.mxu0 0
      %1332 = vmatprep.subr.bf16.mxu0 0
      %1333 = vmatpush1.bf16.msra.mxu0 0
      %1334 = vmatprep.subr.bf16.mxu0 0
      %1335 = vmatpush1.bf16.msra.mxu0 0
      %1336 = vmatprep.subr.bf16.mxu0 0
      %1337 = vmatpush1.bf16.msra.mxu0 0
      %1338 = vmatprep.subr.bf16.mxu0 0
      %1339 = vmatpush1.bf16.msra.mxu0 0
      %1340 = vmatprep.mubr.bf16.mxu0 0
      %1341 = vmatmul.mubr.bf16.gmra.mrb[0].mxu0 %v1306
      %v1342 = vpop.f32.mrb[0].mxu0
      %v1343 = vadd.f32 %v1304, %v1342
      %v1344 = vpop.f32.mrb[0].mxu0
      %v1345 = vpop.f32.mrb[0].mxu0
      %v1346 = vpop.f32.mrb[0].mxu0
      %1347 = vdwg.mxu0
      %v1348 = vpow.pop %v1343
      %v1349 = vmul.f32 %v1300, %v1348
      %v1350 = vsel %vm226, %v1349, 0.0
      %1351 = vadd.xlane.f32.xlu0 %v1350
      %v1352 = vpop.xlane.xlu0 %1351
      %v1353 = vrcp.pop %v1352
      %v1354 = vmul.f32 %v1349, %v1353
    $region18: #{tpu_custom_call.1} parent=1 // loop_footer
      %s273 = sadd.s32 1, %s269
    $region19: #{tpu_custom_call.1} parent=1 // loop_footer_branch
      %268 = sbr.rel target = $region15
    $region20: #{tpu_custom_call.1} parent=1 // loop_exit
      _
    %v1355 = vsel %vm226, %v274, 0.0
    %1356 = vadd.xlane.f32.xlu0 %v1355
    %v1357 = vpop.xlane.xlu0 %1356
    %v1358 = vrcp.pop %v1357
    %v1359 = vmul.f32 %v274, %v1358
    %1360 = vst.msk [vmem:[#allocation5] sm:$0x1] %vm226, %v1359
    // Predicated region
    $region21: #{tpu_custom_call.1} parent=1 // pred_check
      _
    $region22: #{tpu_custom_call.1} parent=1 // pred_check_branch
      %1362 = sbr.rel (0) target = $region24
    $region23: #{tpu_custom_call.1} parent=1 // pred_region
      %s1364 = ssub.s32 16, 16
      %1365 = vsyncadd [#allocation4], %s1364
      %s1367 = sshll.u32 [#allocation5], 4
      %s1368 = int_to_ptr.vmem [resolvable:$true] %s1367
      %1370 = dma.vmem_to_hbm [thread:$0]  %s1368, 16, %s2, [#allocation4]
    $region24: #{tpu_custom_call.1} parent=1 // pred_fallthru
      _
    // Predicated region
    $region25: #{tpu_custom_call.1} parent=1 // pred_check
      _
    $region26: #{tpu_custom_call.1} parent=1 // pred_check_branch
      %1372 = sbr.rel (0) target = $region28
    $region27: #{tpu_custom_call.1} parent=1 // pred_region
      %1373 = dma.done [#allocation4], 16
    $region28: #{tpu_custom_call.1} parent=1 // pred_fallthru
      _
    %1374 = vsyncpa [#allocation3], 1
    %1375 = vsyncpa [#allocation4], 1

</llo_original>
